<compile_context>
chip_gen: v7x
topology: tpu7x:2x2x1
jax: 0.10.0
libtpu: 0.0.40
codegen_flags: <defaults>
</compile_context>

<pallas_src>
import functools

import jax
import jax.numpy as jnp
from jax.experimental import pallas as pl
from jax.experimental.pallas import tpu as pltpu

COMPUTE_DTYPE = jnp.bfloat16          # MXU-native operands; accumulation is f32
_SUBLANE = 16 if COMPUTE_DTYPE == jnp.bfloat16 else 8
_LANE = 128


def _round_up(x, m):
    return ((x + m - 1) // m) * m


def _pick_tile(dim, granule, max_tile):
    """Tile size (multiple of granule, <= max_tile) minimizing total padding."""
    dp0 = _round_up(max(int(dim), 1), granule)
    limit = min(max_tile, dp0)
    best_t, best_dp = granule, _round_up(dp0, granule)
    t = granule
    while t <= limit:
        dp = _round_up(dp0, t)
        if dp < best_dp or (dp == best_dp and t > best_t):
            best_t, best_dp = t, dp
        t += granule
    return best_t, best_dp


# ----------------------------------------------------------------------------
# Tiled matmul + bias (+ReLU) kernels
# ----------------------------------------------------------------------------
def _matmul_bias_kernel_nk1(x_ref, w_ref, b_ref, o_ref, *, relu):
    # Single-K-block case: no accumulator scratch, no init/finalize predication.
    y = jnp.dot(x_ref[...], w_ref[...], preferred_element_type=jnp.float32)
    y = y + b_ref[...]
    if relu:
        y = jnp.maximum(y, 0.0)
    o_ref[...] = y.astype(o_ref.dtype)


def _matmul_bias_kernel(x_ref, w_ref, b_ref, o_ref, acc_ref, *, relu, nk):
    k = pl.program_id(2)

    @pl.when(k == 0)
    def _init():
        acc_ref[...] = jnp.zeros_like(acc_ref)

    acc_ref[...] += jnp.dot(x_ref[...], w_ref[...],
                            preferred_element_type=jnp.float32)

    @pl.when(k == nk - 1)
    def _finalize():
        y = acc_ref[...] + b_ref[...]
        if relu:
            y = jnp.maximum(y, 0.0)
        o_ref[...] = y.astype(o_ref.dtype)


def _matmul_bias_core(x, w_p, b_p, n_out, *, tk, tn, relu, out_dtype):
    """y = x @ w_p + b_p.  x:(M,K) unpadded; w_p:(Kp,Np)/b_p:(1,Np) pre-padded."""
    M, K = x.shape
    Kp, Np = w_p.shape
    tm, Mp = _pick_tile(M, _SUBLANE, 256)
    nk = Kp // tk
    nn = Np // tn

    # v7x megacore: make sure at least one "parallel" grid axis has >= 2 blocks.
    if Mp // tm == 1 and nn == 1 and Mp >= 2 * _SUBLANE:
        half = (Mp // 2) // _SUBLANE * _SUBLANE
        if half >= _SUBLANE and Mp % half == 0:
            tm = half

    xp = x
    if (Mp, Kp) != (M, K):
        xp = jnp.pad(x, ((0, Mp - M), (0, Kp - K)))
    xp = xp.astype(COMPUTE_DTYPE)

    if nk == 1:
        kern = functools.partial(_matmul_bias_kernel_nk1, relu=relu)
        out = pl.pallas_call(
            kern,
            out_shape=jax.ShapeDtypeStruct((Mp, Np), out_dtype),
            grid=(Mp // tm, Np // tn),
            in_specs=[
                pl.BlockSpec((tm, Kp), lambda i, j: (i, 0)),
                pl.BlockSpec((Kp, tn), lambda i, j: (0, j)),
                pl.BlockSpec((1, tn), lambda i, j: (0, j)),
            ],
            out_specs=pl.BlockSpec((tm, tn), lambda i, j: (i, j)),
            compiler_params=pltpu.CompilerParams(
                dimension_semantics=("parallel", "parallel")),
        )(xp, w_p, b_p)
    else:
        kern = functools.partial(_matmul_bias_kernel, relu=relu, nk=nk)
        out = pl.pallas_call(
            kern,
            out_shape=jax.ShapeDtypeStruct((Mp, Np), out_dtype),
            grid=(Mp // tm, Np // tn, nk),
            in_specs=[
                pl.BlockSpec((tm, tk), lambda i, j, k: (i, k)),
                pl.BlockSpec((tk, tn), lambda i, j, k: (k, j)),
                pl.BlockSpec((1, tn), lambda i, j, k: (0, j)),
            ],
            out_specs=pl.BlockSpec((tm, tn), lambda i, j, k: (i, j)),
            scratch_shapes=[pltpu.VMEM((tm, tn), jnp.float32)],
            compiler_params=pltpu.CompilerParams(
                dimension_semantics=("parallel", "parallel", "arbitrary")),
        )(xp, w_p, b_p)
    return out[:M, :n_out]


def pallas_matmul_bias(x, w, b, *, relu=False, out_dtype=jnp.float32):
    """Wrapper for runtime (non-parameter) w/b: pads then calls the core."""
    K, N = w.shape
    tk, Kp = _pick_tile(K, _LANE, 512)
    tn, Np = _pick_tile(N, _LANE, 256)
    w_p = jnp.pad(w, ((0, Kp - K), (0, Np - N))).astype(COMPUTE_DTYPE)
    b_p = jnp.pad(b.reshape(1, N), ((0, 0), (0, Np - N))).astype(jnp.float32)
    return _matmul_bias_core(x, w_p, b_p, N, tk=tk, tn=tn, relu=relu,
                             out_dtype=out_dtype)


# ----------------------------------------------------------------------------
# Global average pooling as a lane-dense MXU matmul (AdaptiveAvgPool2d(1))
# ----------------------------------------------------------------------------
def pallas_global_avg_pool(x):
    """x: (B, S, C) -> (B, C) mean over S via a (B, B*S) pooling matrix."""
    B, S, C = x.shape
    # TODO(synk): the (B, B*S) pooling matrix is only sensible for small
    # feature maps; large spatial sizes would want a tiled reduce instead.
    x2d = x.reshape(B * S, C)
    pool_mat = jnp.repeat(jnp.eye(B, dtype=jnp.float32), S, axis=1) / float(S)
    zero_b = jnp.zeros((C,), jnp.float32)
    return pallas_matmul_bias(pool_mat, x2d, zero_b, relu=False,
                              out_dtype=jnp.float32)


# ----------------------------------------------------------------------------
# Fused FC head (all Linear(+ReLU) layers in one Pallas call)
# ----------------------------------------------------------------------------
def _fc_head_kernel(*refs, n_layers):
    x_ref = refs[0]
    o_ref = refs[-1]
    h = x_ref[...]                                   # bf16 activations
    for i in range(n_layers):
        w_ref = refs[1 + 2 * i]
        b_ref = refs[2 + 2 * i]
        y = jnp.dot(h, w_ref[...], preferred_element_type=jnp.float32)
        y = y + b_ref[...]
        if i < n_layers - 1:
            y = jnp.maximum(y, 0.0)
            # TODO(synk): dropout is train-mode only; identity at inference.
            h = y.astype(COMPUTE_DTYPE)
        else:
            o_ref[...] = y.astype(o_ref.dtype)


def pallas_fc_head(x, fc_params, fc_plan):
    """fc_params[i] = (w_p:(finp,foutp) bf16, b_p:(1,foutp) f32), pre-padded."""
    M, F0 = x.shape
    n_layers = len(fc_params)
    Mp = _round_up(M, _SUBLANE)
    F0p = fc_params[0][0].shape[0]
    out_true = fc_plan[-1]["fout"]
    out_p = fc_params[-1][0].shape[1]

    xp = jnp.pad(x, ((0, Mp - M), (0, F0p - F0))).astype(COMPUTE_DTYPE)

    total_bytes = xp.size * xp.dtype.itemsize + Mp * out_p * 4
    for (w_p, b_p) in fc_params:
        total_bytes += w_p.size * w_p.dtype.itemsize
        total_bytes += b_p.size * b_p.dtype.itemsize

    if total_bytes > (12 << 20):
        # Too big to keep fully resident in VMEM (v5e/v7x scoped limits):
        # fall back to one tiled matmul per layer, chaining padded activations.
        h = xp
        for li, (w_p, b_p) in enumerate(fc_params):
            last = li == n_layers - 1
            tk, _ = _pick_tile(w_p.shape[0], _LANE, 512)
            tn, _ = _pick_tile(w_p.shape[1], _LANE, 256)
            h = _matmul_bias_core(
                h, w_p, b_p, w_p.shape[1], tk=tk, tn=tn, relu=not last,
                out_dtype=jnp.float32 if last else COMPUTE_DTYPE)
        return h[:M, :out_true]

    args = [xp]
    in_specs = [pl.BlockSpec((Mp, F0p), lambda i: (0, 0))]
    for (w_p, b_p) in fc_params:
        finp, foutp = w_p.shape
        args += [w_p, b_p]
        in_specs += [pl.BlockSpec((finp, foutp), lambda i: (0, 0)),
                     pl.BlockSpec((1, foutp), lambda i: (0, 0))]

    vmem_limit = int(min(max(2 * total_bytes + (2 << 20), 8 << 20), 64 << 20))
    kern = functools.partial(_fc_head_kernel, n_layers=n_layers)
    out = pl.pallas_call(
        kern,
        out_shape=jax.ShapeDtypeStruct((Mp, out_p), jnp.float32),
        grid=(1,),
        in_specs=in_specs,
        out_specs=pl.BlockSpec((Mp, out_p), lambda i: (0, 0)),
        compiler_params=pltpu.CompilerParams(vmem_limit_bytes=vmem_limit),
    )(*args)
    return out[:M, :out_true]


# ----------------------------------------------------------------------------
# Conv layer = im2col (glue) + tiled Pallas matmul (hot path)
# ----------------------------------------------------------------------------
def im2col(x_nhwc, stride):
    """3x3 / padding=1 patch extraction.  Returns (N, OH, OW, 9*C)."""
    N, H, W, C = x_nhwc.shape
    xp = jnp.pad(x_nhwc, ((0, 0), (1, 1), (1, 1), (0, 0)))
    OH = (H + 2 - 3) // stride + 1
    OW = (W + 2 - 3) // stride + 1
    cols = []
    for dh in range(3):
        for dw in range(3):
            cols.append(
                xp[:, dh:dh + stride * (OH - 1) + 1:stride,
                   dw:dw + stride * (OW - 1) + 1:stride, :])
    return jnp.concatenate(cols, axis=-1), OH, OW   # column order [dh, dw, c]


def conv3x3_relu(x_nhwc, w_p, b_p, cplan, stride):
    """Conv2d(k=3, padding=1, stride) + ReLU, PyTorch semantics."""
    # TODO(synk): implicit im2col (shifted/strided window DMA per K-axis tap)
    # not implemented; patches are materialized in HBM before the matmul.
    B = x_nhwc.shape[0]
    patches, OH, OW = im2col(x_nhwc, stride)
    x2d = patches.reshape(B * OH * OW, cplan["K"])
    y2d = _matmul_bias_core(x2d, w_p, b_p, cplan["cout"],
                            tk=cplan["tk"], tn=cplan["tn"],
                            relu=True, out_dtype=COMPUTE_DTYPE)
    return y2d.reshape(B, OH, OW, cplan["cout"])


# ----------------------------------------------------------------------------
# Model (block_cnn_pool shared across the 4 views -> concat -> classifier)
# ----------------------------------------------------------------------------
def init_params(key, in_dims, out_classes, channels, strides, fc_sizes):
    del strides  # static, passed to forward separately
    params = {"cnn": [], "fc": []}
    plan = {"conv": [], "fc": []}

    cin = in_dims[0]
    for cout in channels:
        key, kw, kb = jax.random.split(key, 3)
        w = jax.random.normal(kw, (cout, cin, 3, 3), jnp.float32) * 0.1
        b = jax.random.normal(kb, (cout,), jnp.float32) * 0.01
        # OIHW -> (kh, kw, cin, cout) -> (9*cin, cout); row order matches im2col.
        w2d = jnp.transpose(w, (2, 3, 1, 0)).reshape(9 * cin, cout)
        K, N = 9 * cin, cout
        tk, Kp = _pick_tile(K, _LANE, 512)
        tn, Np = _pick_tile(N, _LANE, 256)
        w_p = jnp.pad(w2d, ((0, Kp - K), (0, Np - N))).astype(COMPUTE_DTYPE)
        b_p = jnp.pad(b.reshape(1, N), ((0, 0), (0, Np - N))).astype(jnp.float32)
        params["cnn"].append((w_p, b_p))
        plan["conv"].append(dict(cin=cin, cout=cout, K=K, tk=tk, tn=tn))
        cin = cout

    fin = 4 * channels[-1]
    for fout in list(fc_sizes) + [out_classes]:
        key, kw, kb = jax.random.split(key, 3)
        w = jax.random.normal(kw, (fout, fin), jnp.float32) * 0.1  # torch (out,in)
        b = jax.random.normal(kb, (fout,), jnp.float32) * 0.01
        finp = _round_up(fin, _LANE)
        foutp = _round_up(fout, _LANE)
        w_p = jnp.pad(w.T, ((0, finp - fin), (0, foutp - fout))
                      ).astype(COMPUTE_DTYPE)
        b_p = jnp.pad(b.reshape(1, fout), ((0, 0), (0, foutp - fout))
                      ).astype(jnp.float32)
        params["fc"].append((w_p, b_p))
        plan["fc"].append(dict(fin=fin, fout=fout))
        fin = fout
    return params, plan


def model_forward(params, l_cc, l_mlo, r_cc, r_mlo, *, plan, strides):
    # Batch the 4 views: the shared block_cnn runs once on (4N, H, W, C).
    # TODO(synk): stack + NCHW->NHWC transpose is one extra HBM pass that would
    # disappear if inputs arrived NHWC.
    views = jnp.stack([l_cc, l_mlo, r_cc, r_mlo], axis=0)   # (4, N, C, H, W)
    V, N = views.shape[0], views.shape[1]
    x = views.reshape((V * N,) + views.shape[2:])
    x = jnp.transpose(x, (0, 2, 3, 1)).astype(jnp.float32)  # NCHW -> NHWC

    for (w_p, b_p), cplan, s in zip(params["cnn"], plan["conv"], strides):
        x = conv3x3_relu(x, w_p, b_p, cplan, s)

    B, OH, OW, C = x.shape
    pooled = pallas_global_avg_pool(x.reshape(B, OH * OW, C))   # (4N, C) f32
    # Re-interleave so feature order matches torch.cat([lcc,lmlo,rcc,rmlo], 1)
    feats = pooled.reshape(V, N, C).transpose(1, 0, 2).reshape(N, V * C)

    return pallas_fc_head(feats, params["fc"], plan["fc"])


if __name__ == "__main__":
    # Small shapes consistent with the module.
    in_dims = (1, 16, 16)          # (C, H, W) per view
    out_classes = 3
    channels = [4, 8]
    strides = [2, 2]
    fc_sizes = [32]
    dropouts = [0.5]               # identity at inference
    batch = 2

    key = jax.random.PRNGKey(0)
    key, k1, k2, k3, k4, kp = jax.random.split(key, 6)
    shape = (batch, in_dims[0], in_dims[1], in_dims[2])
    l_cc = jax.random.normal(k1, shape, jnp.float32)
    l_mlo = jax.random.normal(k2, shape, jnp.float32)
    r_cc = jax.random.normal(k3, shape, jnp.float32)
    r_mlo = jax.random.normal(k4, shape, jnp.float32)

    params, plan = init_params(kp, in_dims, out_classes, channels, strides,
                               fc_sizes)

    forward = jax.jit(functools.partial(model_forward, plan=plan,
                                        strides=tuple(strides)))
    out = forward(params, l_cc, l_mlo, r_cc, r_mlo)
    out = jax.block_until_ready(out)
    assert out.shape == (batch, out_classes), out.shape
    print("KERNEL_OK")
</pallas_src>

<mosaic_0001>
module attributes {stable_mosaic.version = 11 : i64} {
  func.func @_matmul_bias_kernel_nk1(%arg0: i32, %arg1: i32, %arg2: memref<256x128xbf16, #tpu.memory_space<vmem>>, %arg3: memref<128x128xbf16, #tpu.memory_space<vmem>>, %arg4: memref<1x128xf32, #tpu.memory_space<vmem>>, %arg5: memref<256x128xbf16, #tpu.memory_space<vmem>>) attributes {dimension_semantics = [#tpu.dimension_semantics<parallel>, #tpu.dimension_semantics<parallel>], iteration_bounds = array<i64: 2, 1>, scalar_prefetch = 0 : i64, scratch_operands = 0 : i64, tpu.core_type = #tpu.core_type<tc>, window_params = [{transform_indices = @transform_0, window_bounds = array<i64: 256, 128>}, {transform_indices = @transform_1, window_bounds = array<i64: 128, 128>}, {transform_indices = @transform_2, window_bounds = array<i64: 1, 128>}, {transform_indices = @transform_3, window_bounds = array<i64: 256, 128>}]} {
    %c0 = arith.constant 0 : index
    %c0_0 = arith.constant 0 : index
    %0 = vector.load %arg2[%c0, %c0_0] : memref<256x128xbf16, #tpu.memory_space<vmem>>, vector<256x128xbf16>
    %c0_1 = arith.constant 0 : index
    %c0_2 = arith.constant 0 : index
    %1 = vector.load %arg3[%c0_1, %c0_2] : memref<128x128xbf16, #tpu.memory_space<vmem>>, vector<128x128xbf16>
    %cst = arith.constant dense<0.000000e+00> : vector<256x128xf32>
    %2 = tpu.matmul %0, %1, %cst {dimension_numbers = #tpu.dot_dimension_numbers<[1], [0], [0], [1], [0, 0, 1, 1], [], []>} : vector<256x128xbf16>, vector<128x128xbf16>, vector<256x128xf32> -> vector<256x128xf32>
    %c0_3 = arith.constant 0 : index
    %c0_4 = arith.constant 0 : index
    %3 = vector.load %arg4[%c0_3, %c0_4] : memref<1x128xf32, #tpu.memory_space<vmem>>, vector<1x128xf32>
    %4 = vector.broadcast %3 : vector<1x128xf32> to vector<256x128xf32>
    %5 = arith.addf %2, %4 : vector<256x128xf32>
    %cst_5 = arith.constant 0.000000e+00 : f32
    %6 = vector.broadcast %cst_5 : f32 to vector<256x128xf32>
    %7 = arith.maximumf %5, %6 : vector<256x128xf32>
    %8 = arith.truncf %7 : vector<256x128xf32> to vector<256x128xbf16>
    %c0_6 = arith.constant 0 : index
    %c0_7 = arith.constant 0 : index
    %9 = vector.load %arg5[%c0_6, %c0_7] : memref<256x128xbf16, #tpu.memory_space<vmem>>, vector<256x128xbf16>
    tpu.vector_store %arg5[%c0_6, %c0_7], %8 {strides = array<i32>} : memref<256x128xbf16, #tpu.memory_space<vmem>>, vector<256x128xbf16>,
    return
  }
  func.func @transform_0(%arg0: i32, %arg1: i32) -> (i32, i32) {
    %c0_i32 = arith.constant 0 : i32
    %c0_i32_0 = arith.constant 0 : i32
    return %arg0, %c0_i32 : i32, i32
  }
  func.func @transform_1(%arg0: i32, %arg1: i32) -> (i32, i32) {
    %c0_i32 = arith.constant 0 : i32
    %c0_i32_0 = arith.constant 0 : i32
    return %c0_i32, %arg1 : i32, i32
  }
  func.func @transform_2(%arg0: i32, %arg1: i32) -> (i32, i32) {
    %c0_i32 = arith.constant 0 : i32
    %c0_i32_0 = arith.constant 0 : i32
    return %c0_i32, %arg1 : i32, i32
  }
  func.func @transform_3(%arg0: i32, %arg1: i32) -> (i32, i32) {
    %c0_i32 = arith.constant 0 : i32
    return %arg0, %arg1 : i32, i32
  }
}

module attributes {stable_mosaic.version = 11 : i64} {
  func.func @_matmul_bias_kernel_nk1(%arg0: i32, %arg1: i32, %arg2: memref<64x128xbf16, #tpu.memory_space<vmem>>, %arg3: memref<128x128xbf16, #tpu.memory_space<vmem>>, %arg4: memref<1x128xf32, #tpu.memory_space<vmem>>, %arg5: memref<64x128xbf16, #tpu.memory_space<vmem>>) attributes {dimension_semantics = [#tpu.dimension_semantics<parallel>, #tpu.dimension_semantics<parallel>], iteration_bounds = array<i64: 2, 1>, scalar_prefetch = 0 : i64, scratch_operands = 0 : i64, tpu.core_type = #tpu.core_type<tc>, window_params = [{transform_indices = @transform_0, window_bounds = array<i64: 64, 128>}, {transform_indices = @transform_1, window_bounds = array<i64: 128, 128>}, {transform_indices = @transform_2, window_bounds = array<i64: 1, 128>}, {transform_indices = @transform_3, window_bounds = array<i64: 64, 128>}]} {
    %c0 = arith.constant 0 : index
    %c0_0 = arith.constant 0 : index
    %0 = vector.load %arg2[%c0, %c0_0] : memref<64x128xbf16, #tpu.memory_space<vmem>>, vector<64x128xbf16>
    %c0_1 = arith.constant 0 : index
    %c0_2 = arith.constant 0 : index
    %1 = vector.load %arg3[%c0_1, %c0_2] : memref<128x128xbf16, #tpu.memory_space<vmem>>, vector<128x128xbf16>
    %cst = arith.constant dense<0.000000e+00> : vector<64x128xf32>
    %2 = tpu.matmul %0, %1, %cst {dimension_numbers = #tpu.dot_dimension_numbers<[1], [0], [0], [1], [0, 0, 1, 1], [], []>} : vector<64x128xbf16>, vector<128x128xbf16>, vector<64x128xf32> -> vector<64x128xf32>
    %c0_3 = arith.constant 0 : index
    %c0_4 = arith.constant 0 : index
    %3 = vector.load %arg4[%c0_3, %c0_4] : memref<1x128xf32, #tpu.memory_space<vmem>>, vector<1x128xf32>
    %4 = vector.broadcast %3 : vector<1x128xf32> to vector<64x128xf32>
    %5 = arith.addf %2, %4 : vector<64x128xf32>
    %cst_5 = arith.constant 0.000000e+00 : f32
    %6 = vector.broadcast %cst_5 : f32 to vector<64x128xf32>
    %7 = arith.maximumf %5, %6 : vector<64x128xf32>
    %8 = arith.truncf %7 : vector<64x128xf32> to vector<64x128xbf16>
    %c0_6 = arith.constant 0 : index
    %c0_7 = arith.constant 0 : index
    %9 = vector.load %arg5[%c0_6, %c0_7] : memref<64x128xbf16, #tpu.memory_space<vmem>>, vector<64x128xbf16>
    tpu.vector_store %arg5[%c0_6, %c0_7], %8 {strides = array<i32>} : memref<64x128xbf16, #tpu.memory_space<vmem>>, vector<64x128xbf16>,
    return
  }
  func.func @transform_0(%arg0: i32, %arg1: i32) -> (i32, i32) {
    %c0_i32 = arith.constant 0 : i32
    %c0_i32_0 = arith.constant 0 : i32
    return %arg0, %c0_i32 : i32, i32
  }
  func.func @transform_1(%arg0: i32, %arg1: i32) -> (i32, i32) {
    %c0_i32 = arith.constant 0 : i32
    %c0_i32_0 = arith.constant 0 : i32
    return %c0_i32, %arg1 : i32, i32
  }
  func.func @transform_2(%arg0: i32, %arg1: i32) -> (i32, i32) {
    %c0_i32 = arith.constant 0 : i32
    %c0_i32_0 = arith.constant 0 : i32
    return %c0_i32, %arg1 : i32, i32
  }
  func.func @transform_3(%arg0: i32, %arg1: i32) -> (i32, i32) {
    %c0_i32 = arith.constant 0 : i32
    return %arg0, %arg1 : i32, i32
  }
}

module attributes {stable_mosaic.version = 11 : i64} {
  func.func @_matmul_bias_kernel_nk1(%arg0: i32, %arg1: i32, %arg2: memref<16x128xbf16, #tpu.memory_space<vmem>>, %arg3: memref<128x128xbf16, #tpu.memory_space<vmem>>, %arg4: memref<1x128xf32, #tpu.memory_space<vmem>>, %arg5: memref<16x128xf32, #tpu.memory_space<vmem>>) attributes {dimension_semantics = [#tpu.dimension_semantics<parallel>, #tpu.dimension_semantics<parallel>], iteration_bounds = array<i64: 1, 1>, scalar_prefetch = 0 : i64, scratch_operands = 0 : i64, tpu.core_type = #tpu.core_type<tc>, window_params = [{transform_indices = @transform_0, window_bounds = array<i64: 16, 128>}, {transform_indices = @transform_1, window_bounds = array<i64: 128, 128>}, {transform_indices = @transform_2, window_bounds = array<i64: 1, 128>}, {transform_indices = @transform_3, window_bounds = array<i64: 16, 128>}]} {
    %c0 = arith.constant 0 : index
    %c0_0 = arith.constant 0 : index
    %0 = vector.load %arg2[%c0, %c0_0] : memref<16x128xbf16, #tpu.memory_space<vmem>>, vector<16x128xbf16>
    %c0_1 = arith.constant 0 : index
    %c0_2 = arith.constant 0 : index
    %1 = vector.load %arg3[%c0_1, %c0_2] : memref<128x128xbf16, #tpu.memory_space<vmem>>, vector<128x128xbf16>
    %cst = arith.constant dense<0.000000e+00> : vector<16x128xf32>
    %2 = tpu.matmul %0, %1, %cst {dimension_numbers = #tpu.dot_dimension_numbers<[1], [0], [0], [1], [0, 0, 1, 1], [], []>} : vector<16x128xbf16>, vector<128x128xbf16>, vector<16x128xf32> -> vector<16x128xf32>
    %c0_3 = arith.constant 0 : index
    %c0_4 = arith.constant 0 : index
    %3 = vector.load %arg4[%c0_3, %c0_4] : memref<1x128xf32, #tpu.memory_space<vmem>>, vector<1x128xf32>
    %4 = vector.broadcast %3 : vector<1x128xf32> to vector<16x128xf32>
    %5 = arith.addf %2, %4 : vector<16x128xf32>
    %c0_5 = arith.constant 0 : index
    %c0_6 = arith.constant 0 : index
    %6 = vector.load %arg5[%c0_5, %c0_6] : memref<16x128xf32, #tpu.memory_space<vmem>>, vector<16x128xf32>
    tpu.vector_store %arg5[%c0_5, %c0_6], %5 {strides = array<i32>} : memref<16x128xf32, #tpu.memory_space<vmem>>, vector<16x128xf32>,
    return
  }
  func.func @transform_0(%arg0: i32, %arg1: i32) -> (i32, i32) {
    %c0_i32 = arith.constant 0 : i32
    %c0_i32_0 = arith.constant 0 : i32
    return %arg0, %c0_i32 : i32, i32
  }
  func.func @transform_1(%arg0: i32, %arg1: i32) -> (i32, i32) {
    %c0_i32 = arith.constant 0 : i32
    %c0_i32_0 = arith.constant 0 : i32
    return %c0_i32, %arg1 : i32, i32
  }
  func.func @transform_2(%arg0: i32, %arg1: i32) -> (i32, i32) {
    %c0_i32 = arith.constant 0 : i32
    %c0_i32_0 = arith.constant 0 : i32
    return %c0_i32, %arg1 : i32, i32
  }
  func.func @transform_3(%arg0: i32, %arg1: i32) -> (i32, i32) {
    %c0_i32 = arith.constant 0 : i32
    return %arg0, %arg1 : i32, i32
  }
}

module attributes {stable_mosaic.version = 11 : i64} {
  func.func @_fc_head_kernel(%arg0: i32, %arg1: memref<16x128xbf16, #tpu.memory_space<vmem>>, %arg2: memref<128x128xbf16, #tpu.memory_space<vmem>>, %arg3: memref<1x128xf32, #tpu.memory_space<vmem>>, %arg4: memref<128x128xbf16, #tpu.memory_space<vmem>>, %arg5: memref<1x128xf32, #tpu.memory_space<vmem>>, %arg6: memref<16x128xf32, #tpu.memory_space<vmem>>) attributes {dimension_semantics = [#tpu.dimension_semantics<arbitrary>], iteration_bounds = array<i64: 1>, scalar_prefetch = 0 : i64, scratch_operands = 0 : i64, tpu.core_type = #tpu.core_type<tc>, window_params = [{pipeline_mode = #tpu.pipeline_mode<synchronous>, transform_indices = @transform_0, window_bounds = array<i64: 16, 128>}, {pipeline_mode = #tpu.pipeline_mode<synchronous>, transform_indices = @transform_1, window_bounds = array<i64: 128, 128>}, {pipeline_mode = #tpu.pipeline_mode<synchronous>, transform_indices = @transform_2, window_bounds = array<i64: 1, 128>}, {pipeline_mode = #tpu.pipeline_mode<synchronous>, transform_indices = @transform_3, window_bounds = array<i64: 128, 128>}, {pipeline_mode = #tpu.pipeline_mode<synchronous>, transform_indices = @transform_4, window_bounds = array<i64: 1, 128>}, {pipeline_mode = #tpu.pipeline_mode<synchronous>, transform_indices = @transform_5, window_bounds = array<i64: 16, 128>}]} {
    %c0 = arith.constant 0 : index
    %c0_0 = arith.constant 0 : index
    %0 = vector.load %arg1[%c0, %c0_0] : memref<16x128xbf16, #tpu.memory_space<vmem>>, vector<16x128xbf16>
    %c0_1 = arith.constant 0 : index
    %c0_2 = arith.constant 0 : index
    %1 = vector.load %arg2[%c0_1, %c0_2] : memref<128x128xbf16, #tpu.memory_space<vmem>>, vector<128x128xbf16>
    %cst = arith.constant dense<0.000000e+00> : vector<16x128xf32>
    %2 = tpu.matmul %0, %1, %cst {dimension_numbers = #tpu.dot_dimension_numbers<[1], [0], [0], [1], [0, 0, 1, 1], [], []>} : vector<16x128xbf16>, vector<128x128xbf16>, vector<16x128xf32> -> vector<16x128xf32>
    %c0_3 = arith.constant 0 : index
    %c0_4 = arith.constant 0 : index
    %3 = vector.load %arg3[%c0_3, %c0_4] : memref<1x128xf32, #tpu.memory_space<vmem>>, vector<1x128xf32>
    %4 = vector.broadcast %3 : vector<1x128xf32> to vector<16x128xf32>
    %5 = arith.addf %2, %4 : vector<16x128xf32>
    %cst_5 = arith.constant 0.000000e+00 : f32
    %6 = vector.broadcast %cst_5 : f32 to vector<16x128xf32>
    %7 = arith.maximumf %5, %6 : vector<16x128xf32>
    %8 = arith.truncf %7 : vector<16x128xf32> to vector<16x128xbf16>
    %c0_6 = arith.constant 0 : index
    %c0_7 = arith.constant 0 : index
    %9 = vector.load %arg4[%c0_6, %c0_7] : memref<128x128xbf16, #tpu.memory_space<vmem>>, vector<128x128xbf16>
    %cst_8 = arith.constant dense<0.000000e+00> : vector<16x128xf32>
    %10 = tpu.matmul %8, %9, %cst_8 {dimension_numbers = #tpu.dot_dimension_numbers<[1], [0], [0], [1], [0, 0, 1, 1], [], []>} : vector<16x128xbf16>, vector<128x128xbf16>, vector<16x128xf32> -> vector<16x128xf32>
    %c0_9 = arith.constant 0 : index
    %c0_10 = arith.constant 0 : index
    %11 = vector.load %arg5[%c0_9, %c0_10] : memref<1x128xf32, #tpu.memory_space<vmem>>, vector<1x128xf32>
    %12 = vector.broadcast %11 : vector<1x128xf32> to vector<16x128xf32>
    %13 = arith.addf %10, %12 : vector<16x128xf32>
    %c0_11 = arith.constant 0 : index
    %c0_12 = arith.constant 0 : index
    %14 = vector.load %arg6[%c0_11, %c0_12] : memref<16x128xf32, #tpu.memory_space<vmem>>, vector<16x128xf32>
    tpu.vector_store %arg6[%c0_11, %c0_12], %13 {strides = array<i32>} : memref<16x128xf32, #tpu.memory_space<vmem>>, vector<16x128xf32>,
    return
  }
  func.func @transform_0(%arg0: i32) -> (i32, i32) {
    %c0_i32 = arith.constant 0 : i32
    %c0_i32_0 = arith.constant 0 : i32
    %c0_i32_1 = arith.constant 0 : i32
    return %c0_i32, %c0_i32_0 : i32, i32
  }
  func.func @transform_1(%arg0: i32) -> (i32, i32) {
    %c0_i32 = arith.constant 0 : i32
    %c0_i32_0 = arith.constant 0 : i32
    %c0_i32_1 = arith.constant 0 : i32
    return %c0_i32, %c0_i32_0 : i32, i32
  }
  func.func @transform_2(%arg0: i32) -> (i32, i32) {
    %c0_i32 = arith.constant 0 : i32
    %c0_i32_0 = arith.constant 0 : i32
    %c0_i32_1 = arith.constant 0 : i32
    return %c0_i32, %c0_i32_0 : i32, i32
  }
  func.func @transform_3(%arg0: i32) -> (i32, i32) {
    %c0_i32 = arith.constant 0 : i32
    %c0_i32_0 = arith.constant 0 : i32
    %c0_i32_1 = arith.constant 0 : i32
    return %c0_i32, %c0_i32_0 : i32, i32
  }
  func.func @transform_4(%arg0: i32) -> (i32, i32) {
    %c0_i32 = arith.constant 0 : i32
    %c0_i32_0 = arith.constant 0 : i32
    %c0_i32_1 = arith.constant 0 : i32
    return %c0_i32, %c0_i32_0 : i32, i32
  }
  func.func @transform_5(%arg0: i32) -> (i32, i32) {
    %c0_i32 = arith.constant 0 : i32
    %c0_i32_0 = arith.constant 0 : i32
    %c0_i32_1 = arith.constant 0 : i32
    return %c0_i32, %c0_i32_0 : i32, i32
  }
}

</mosaic_0001>

<llo_original>
// kernel: model_forward.4
$region0: #{model_forward.4}
  #allocation0 [shape = 'u32[]', space=smem, size = 0x4, offset = 0x4, fixed_abs, tag = 'smem constant byte address 0x4 - core index']
  #allocation1 [shape = 'u32[144,128]{1,0:T(1,128)}', space=vmem, size = 0x12000, scoped, tag = 'internal scratch']
  %s0 = inlined_call_operand.vmem [shape: bf16[512,128], index: 0, kind: input, shape index: {}]
  %s1 = inlined_call_operand.vmem [shape: bf16[128,128], index: 1, kind: input, shape index: {}]
  %s2 = inlined_call_operand.vmem [shape: f32[1,128], index: 2, kind: input, shape index: {}]
  %s3 = inlined_call_operand.vmem [shape: bf16[512,128], index: 3, kind: output, shape index: {}]
  %s4 = sld [smem:[#allocation0]]
  $region45: #{model_forward.4} parent=0
    _
  %s6 = ssub.s32 1, %s4
  %s7 = scalar_select 0, %s6, %s4
  loop: start=0, step=1, limit=4
  $region2: #{model_forward.4} parent=0 // loop_pre_header
    _
  $region3: #{model_forward.4} parent=0 // loop_header
    %s9 = sphi 0, %s13
    %p10 = scmp.ge.s32.totalorder %s9, 4
    %s16 = sphi 0, %s28
    %s17 = sphi 0, %s24
    %s18 = sphi 0, %s16
    %s19 = sphi 0, %s17
    %s20 = sphi 0, %s18
    %s21 = sphi 0, %s19
    %s31 = sphi 0, %s33
    %s34 = sphi 0, %s31
    %s35 = sphi 0, %s34
    %s51 = sphi 0, %s35
    %s57 = sphi 0, %s59
    %s60 = sphi 0, %s57
    %s61 = sphi 0, %s60
    %s77 = sphi 0, %s61
    %s83 = sphi 0, %s85
    %s86 = sphi 0, %s83
    %s87 = sphi 0, %s86
    %s103 = sphi 0, %s87
    %s111 = sphi 0, %s113
    %s114 = sphi 0, %s111
    %s115 = sphi 0, %s114
    %s131 = sphi 0, %s115
  $region4: #{model_forward.4} parent=0 // loop_header_branch
    %12 = sbr.rel (%p10) target = $region8
  $region5: #{model_forward.4} parent=0 // loop_body
    %s14 = ssub.s32 %s9, 1
    %s15 = ssub.s32 %s9, 2
    %s22 = sadd.s32 1, %s17
    %p23 = scmp.ge.s32.totalorder %s22, 1
    %s24 = scalar_select %p23, 0, %s22
    %s25 = sadd.s32 1, %s16
    %s26 = scalar_select %p23, %s25, %s16
    %p27 = scmp.ge.s32.totalorder %s26, 2
    %s28 = scalar_select %p27, 0, %s26
    %s29 = ssub.s32 %s16, %s28
    %p30 = scmp.eq.s32.totalorder %s29, 0
    %s32 = sadd.s32 %s31, 1
    %s33 = scalar_select %p30, %s31, %s32
    %p36 = pneg %p30
    %p37 = scmp.eq.s32.totalorder %s9, 1
    %p38 = por %p36, %p37
    %p39 = scmp.ne.s32.totalorder %s31, %s34
    %p40 = scmp.eq.s32.totalorder %s9, 0
    %p41 = por %p39, %p40
    %p42 = scmp.ne.s32.totalorder %s31, %s34
    %p43 = scmp.eq.s32.totalorder %s14, 1
    %p44 = por %p42, %p43
    %p45 = scmp.ne.s32.totalorder %s34, %s35
    %p46 = scmp.eq.s32.totalorder %s14, 0
    %p47 = por %p45, %p46
    %p48 = scmp.ne.s32.totalorder %s34, %s35
    %p49 = scmp.eq.s32.totalorder %s15, 1
    %p50 = por %p48, %p49
    %p52 = scmp.ne.s32.totalorder %s35, %s51
    %p53 = scmp.eq.s32.totalorder %s15, 0
    %p54 = por %p52, %p53
    %s55 = ssub.s32 %s17, %s24
    %p56 = scmp.eq.s32.totalorder %s55, 0
    %s58 = sadd.s32 %s57, 1
    %s59 = scalar_select %p56, %s57, %s58
    %p62 = pneg %p56
    %p63 = scmp.eq.s32.totalorder %s9, 1
    %p64 = por %p62, %p63
    %p65 = scmp.ne.s32.totalorder %s57, %s60
    %p66 = scmp.eq.s32.totalorder %s9, 0
    %p67 = por %p65, %p66
    %p68 = scmp.ne.s32.totalorder %s57, %s60
    %p69 = scmp.eq.s32.totalorder %s14, 1
    %p70 = por %p68, %p69
    %p71 = scmp.ne.s32.totalorder %s60, %s61
    %p72 = scmp.eq.s32.totalorder %s14, 0
    %p73 = por %p71, %p72
    %p74 = scmp.ne.s32.totalorder %s60, %s61
    %p75 = scmp.eq.s32.totalorder %s15, 1
    %p76 = por %p74, %p75
    %p78 = scmp.ne.s32.totalorder %s61, %s77
    %p79 = scmp.eq.s32.totalorder %s15, 0
    %p80 = por %p78, %p79
    %s81 = ssub.s32 %s17, %s24
    %p82 = scmp.eq.s32.totalorder %s81, 0
    %s84 = sadd.s32 %s83, 1
    %s85 = scalar_select %p82, %s83, %s84
    %p88 = pneg %p82
    %p89 = scmp.eq.s32.totalorder %s9, 1
    %p90 = por %p88, %p89
    %p91 = scmp.ne.s32.totalorder %s83, %s86
    %p92 = scmp.eq.s32.totalorder %s9, 0
    %p93 = por %p91, %p92
    %p94 = scmp.ne.s32.totalorder %s83, %s86
    %p95 = scmp.eq.s32.totalorder %s14, 1
    %p96 = por %p94, %p95
    %p97 = scmp.ne.s32.totalorder %s86, %s87
    %p98 = scmp.eq.s32.totalorder %s14, 0
    %p99 = por %p97, %p98
    %p100 = scmp.ne.s32.totalorder %s86, %s87
    %p101 = scmp.eq.s32.totalorder %s15, 1
    %p102 = por %p100, %p101
    %p104 = scmp.ne.s32.totalorder %s87, %s103
    %p105 = scmp.eq.s32.totalorder %s15, 0
    %p106 = por %p104, %p105
    %s107 = ssub.s32 %s16, %s28
    %s108 = ssub.s32 %s17, %s24
    %s109 = sor.u32 %s107, %s108
    %p110 = scmp.eq.s32.totalorder %s109, 0
    %s112 = sadd.s32 %s111, 1
    %s113 = scalar_select %p110, %s111, %s112
    %p116 = pneg %p110
    %p117 = scmp.eq.s32.totalorder %s9, 1
    %p118 = por %p116, %p117
    %p119 = scmp.ne.s32.totalorder %s111, %s114
    %p120 = scmp.eq.s32.totalorder %s9, 0
    %p121 = por %p119, %p120
    %p122 = scmp.ne.s32.totalorder %s111, %s114
    %p123 = scmp.eq.s32.totalorder %s14, 1
    %p124 = por %p122, %p123
    %p125 = scmp.ne.s32.totalorder %s114, %s115
    %p126 = scmp.eq.s32.totalorder %s14, 0
    %p127 = por %p125, %p126
    %p128 = scmp.ne.s32.totalorder %s114, %s115
    %p129 = scmp.eq.s32.totalorder %s15, 1
    %p130 = por %p128, %p129
    %p132 = scmp.ne.s32.totalorder %s115, %s131
    %p133 = scmp.eq.s32.totalorder %s15, 0
    %p134 = por %p132, %p133
    %p135 = scmp.le.s32.totalorder 1, %s9
    %p136 = scmp.lt.s32.totalorder %s9, 3
    %p137 = pnand %p135, %p136
    %p138 = pneg %p137
    // Predicated region
    $region9: #{model_forward.4} parent=5 // pred_check
      _
    $region10: #{model_forward.4} parent=5 // pred_check_branch
      %140 = sbr.rel (%p137) target = $region12
    $region11: #{model_forward.4} parent=5 // pred_region
      %s141 = ssub.s32 %s9, 1
      // Predicated region
      $region13: #{model_forward.4} parent=11 // pred_check
        %p142 = pneg %p73
      $region14: #{model_forward.4} parent=11 // pred_check_branch
        %144 = sbr.rel (%p142) target = $region16
      $region15: #{model_forward.4} parent=11 // pred_region
        %p145 = scmp.lt.s32.totalorder %s19, 0
        %s146 = scalar_select %p145, %s19, 0
        %s147 = smul.addr %s146, 4
        %s148 = scalar_lea.vmem %s1, %s147
      $region16: #{model_forward.4} parent=11 // pred_fallthru
        _
      // Predicated region
      $region17: #{model_forward.4} parent=11 // pred_check
        %p149 = pneg %p99
      $region18: #{model_forward.4} parent=11 // pred_check_branch
        %151 = sbr.rel (%p149) target = $region20
      $region19: #{model_forward.4} parent=11 // pred_region
        %p152 = scmp.lt.s32.totalorder %s19, 0
        %s153 = scalar_select %p152, %s19, 0
        %s154 = scalar_lea.vmem %s2, %s153
      $region20: #{model_forward.4} parent=11 // pred_fallthru
        _
    $region12: #{model_forward.4} parent=5 // pred_fallthru
      _
    %p155 = scmp.lt.s32.totalorder %s9, 2
    // Predicated region
    $region21: #{model_forward.4} parent=5 // pred_check
      %p156 = pneg %p155
    $region22: #{model_forward.4} parent=5 // pred_check_branch
      %158 = sbr.rel (%p156) target = $region24
    $region23: #{model_forward.4} parent=5 // pred_region
      // Predicated region
      $region25: #{model_forward.4} parent=23 // pred_check
        %p159 = pneg %p41
      $region26: #{model_forward.4} parent=23 // pred_check_branch
        %161 = sbr.rel (%p159) target = $region28
      $region27: #{model_forward.4} parent=23 // pred_region
        %s162 = smul.u32 32, %s16
        %p163 = scmp.lt.s32.totalorder %s162, 63
        %s164 = scalar_select %p163, %s162, 63
        %s165 = smul.addr %s164, 4
        %s166 = scalar_lea.vmem %s0, %s165
        %s167 = smul.u32 32, %s16
      $region28: #{model_forward.4} parent=23 // pred_fallthru
        _
    $region24: #{model_forward.4} parent=5 // pred_fallthru
      _
    %p168 = scmp.le.s32.totalorder 1, %s9
    %p169 = scmp.lt.s32.totalorder %s9, 3
    %p170 = pnand %p168, %p169
    %p171 = pneg %p170
    // Predicated region
    $region29: #{model_forward.4} parent=5 // pred_check
      _
    $region30: #{model_forward.4} parent=5 // pred_check_branch
      %173 = sbr.rel (%p170) target = $region32
    $region31: #{model_forward.4} parent=5 // pred_region
      %s174 = ssub.s32 %s9, 1
      %s175 = smul.u32 32, %s18
      %p176 = scmp.lt.s32.totalorder %s175, 63
      %s177 = scalar_select %p176, %s175, 63
      %s178 = smul.addr %s177, 4
      %s179 = scalar_lea.vmem %s0, %s178
      %p180 = pneg %p47
      %p181 = pneg %p44
      %p182 = scmp.lt.s32.totalorder %s19, 0
      %s183 = scalar_select %p182, %s19, 0
      %s184 = smul.addr %s183, 4
      %s185 = scalar_lea.vmem %s1, %s184
      %p186 = pneg %p73
      %p187 = pneg %p70
      %p188 = scmp.lt.s32.totalorder %s19, 0
      %s189 = scalar_select %p188, %s19, 0
      %s190 = scalar_lea.vmem %s2, %s189
      %p191 = pneg %p99
      %p192 = pneg %p96
      %p193 = pneg %p127
      %p194 = pneg %p124
      %s195 = smul.u32 32, %s18
      %p196 = scmp.lt.s32.totalorder %s195, 63
      %s197 = scalar_select %p196, %s195, 63
      %p198 = scmp.lt.s32.totalorder %s19, 0
      %s199 = scalar_select %p198, %s19, 0
      %s200 = sadd.s32 %s199, %s197
      %s201 = smul.addr %s200, 4
      %s202 = scalar_lea.vmem %s3, %s201
      %s203 = smul.u32 32, %s18
      %p204 = scmp.lt.s32.totalorder %s203, 63
      %s205 = scalar_select %p204, %s203, 63
      %s206 = smul.addr %s205, 4
      %s207 = scalar_lea.vmem %s0, %s206
      %s208 = smul.u32 32, %s18
      %p209 = scmp.lt.s32.totalorder %s19, 0
      %s210 = scalar_select %p209, %s19, 0
      %s211 = smul.addr %s210, 4
      %s212 = scalar_lea.vmem %s1, %s211
      %p213 = scmp.lt.s32.totalorder %s19, 0
      %s214 = scalar_select %p213, %s19, 0
      %s215 = scalar_lea.vmem %s2, %s214
      %s216 = smul.u32 32, %s18
      %p217 = scmp.lt.s32.totalorder %s216, 63
      %s218 = scalar_select %p217, %s216, 63
      %p219 = scmp.lt.s32.totalorder %s19, 0
      %s220 = scalar_select %p219, %s19, 0
      %s221 = sadd.s32 %s220, %s218
      %s222 = smul.addr %s221, 4
      %s223 = scalar_lea.vmem %s3, %s222
      %s224 = smul.u32 32, %s18
      %v226 = vld [vmem:[%s207] sm:$0xf]
      %v227 = vld [vmem:[%s207 + $0x4] sm:$0xf]
      %v228 = vld [vmem:[%s207 + $0x8] sm:$0xf]
      %v229 = vld [vmem:[%s207 + $0xc] sm:$0xf]
      %v230 = vld [vmem:[%s207 + $0x10] sm:$0xf]
      %v231 = vld [vmem:[%s207 + $0x14] sm:$0xf]
      %v232 = vld [vmem:[%s207 + $0x18] sm:$0xf]
      %v233 = vld [vmem:[%s207 + $0x1c] sm:$0xf]
      %v234 = vld [vmem:[%s207 + $0x20] sm:$0xf]
      %v235 = vld [vmem:[%s207 + $0x24] sm:$0xf]
      %v236 = vld [vmem:[%s207 + $0x28] sm:$0xf]
      %v237 = vld [vmem:[%s207 + $0x2c] sm:$0xf]
      %v238 = vld [vmem:[%s207 + $0x30] sm:$0xf]
      %v239 = vld [vmem:[%s207 + $0x34] sm:$0xf]
      %v240 = vld [vmem:[%s207 + $0x38] sm:$0xf]
      %v241 = vld [vmem:[%s207 + $0x3c] sm:$0xf]
      %v242 = vld [vmem:[%s207 + $0x40] sm:$0xf]
      %v243 = vld [vmem:[%s207 + $0x44] sm:$0xf]
      %v244 = vld [vmem:[%s207 + $0x48] sm:$0xf]
      %v245 = vld [vmem:[%s207 + $0x4c] sm:$0xf]
      %v246 = vld [vmem:[%s207 + $0x50] sm:$0xf]
      %v247 = vld [vmem:[%s207 + $0x54] sm:$0xf]
      %v248 = vld [vmem:[%s207 + $0x58] sm:$0xf]
      %v249 = vld [vmem:[%s207 + $0x5c] sm:$0xf]
      %v250 = vld [vmem:[%s207 + $0x60] sm:$0xf]
      %v251 = vld [vmem:[%s207 + $0x64] sm:$0xf]
      %v252 = vld [vmem:[%s207 + $0x68] sm:$0xf]
      %v253 = vld [vmem:[%s207 + $0x6c] sm:$0xf]
      %v254 = vld [vmem:[%s207 + $0x70] sm:$0xf]
      %v255 = vld [vmem:[%s207 + $0x74] sm:$0xf]
      %v256 = vld [vmem:[%s207 + $0x78] sm:$0xf]
      %v257 = vld [vmem:[%s207 + $0x7c] sm:$0xf]
      %v258 = vld [vmem:[%s212] sm:$0xf]
      %v259 = vld [vmem:[%s212 + $0x4] sm:$0xf]
      %v260 = vld [vmem:[%s212 + $0x8] sm:$0xf]
      %v261 = vld [vmem:[%s212 + $0xc] sm:$0xf]
      %v262 = vld [vmem:[%s212 + $0x10] sm:$0xf]
      %v263 = vld [vmem:[%s212 + $0x14] sm:$0xf]
      %v264 = vld [vmem:[%s212 + $0x18] sm:$0xf]
      %v265 = vld [vmem:[%s212 + $0x1c] sm:$0xf]
      %v266 = vld [vmem:[%s212 + $0x20] sm:$0xf]
      %v267 = vld [vmem:[%s212 + $0x24] sm:$0xf]
      %v268 = vld [vmem:[%s212 + $0x28] sm:$0xf]
      %v269 = vld [vmem:[%s212 + $0x2c] sm:$0xf]
      %v270 = vld [vmem:[%s212 + $0x30] sm:$0xf]
      %v271 = vld [vmem:[%s212 + $0x34] sm:$0xf]
      %v272 = vld [vmem:[%s212 + $0x38] sm:$0xf]
      %v273 = vld [vmem:[%s212 + $0x3c] sm:$0xf]
      %v274 = vld [vmem:[%s215] sm:$0x1]
      %v276 = vlaneseq
      %v277 = vshrl.u32 %v276, 7
      %v278 = vsub.s32 0, %v277
      %v279 = vrot.slane %v274, %v278
      %v313 = vunpack.c.l.b16 %v226
      %v314 = vunpack.c.l.b16 %v227
      %v315 = vunpack.c.l.b16 %v228
      %v316 = vunpack.c.l.b16 %v229
      %v317 = vunpack.c.l.b16 %v230
      %v318 = vunpack.c.l.b16 %v231
      %v319 = vunpack.c.l.b16 %v232
      %v320 = vunpack.c.l.b16 %v233
      %v321 = vunpack.c.l.b16 %v234
      %v322 = vunpack.c.l.b16 %v235
      %v323 = vunpack.c.l.b16 %v236
      %v324 = vunpack.c.l.b16 %v237
      %v325 = vunpack.c.l.b16 %v238
      %v326 = vunpack.c.l.b16 %v239
      %v327 = vunpack.c.l.b16 %v240
      %v328 = vunpack.c.l.b16 %v241
      %v329 = vunpack.c.l.b16 %v242
      %v330 = vunpack.c.l.b16 %v243
      %v331 = vunpack.c.l.b16 %v244
      %v332 = vunpack.c.l.b16 %v245
      %v333 = vunpack.c.l.b16 %v246
      %v334 = vunpack.c.l.b16 %v247
      %v335 = vunpack.c.l.b16 %v248
      %v336 = vunpack.c.l.b16 %v249
      %v337 = vunpack.c.l.b16 %v250
      %v338 = vunpack.c.l.b16 %v251
      %v339 = vunpack.c.l.b16 %v252
      %v340 = vunpack.c.l.b16 %v253
      %v341 = vunpack.c.l.b16 %v254
      %v342 = vunpack.c.l.b16 %v255
      %v343 = vunpack.c.l.b16 %v256
      %v344 = vunpack.c.l.b16 %v257
      %v345 = vpack.c.b16 %v314, %v313
      %v346 = vpack.c.b16 %v316, %v315
      %v347 = vpack.c.b16 %v318, %v317
      %v348 = vpack.c.b16 %v320, %v319
      %v349 = vpack.c.b16 %v322, %v321
      %v350 = vpack.c.b16 %v324, %v323
      %v351 = vpack.c.b16 %v326, %v325
      %v352 = vpack.c.b16 %v328, %v327
      %v353 = vpack.c.b16 %v330, %v329
      %v354 = vpack.c.b16 %v332, %v331
      %v355 = vpack.c.b16 %v334, %v333
      %v356 = vpack.c.b16 %v336, %v335
      %v357 = vpack.c.b16 %v338, %v337
      %v358 = vpack.c.b16 %v340, %v339
      %v359 = vpack.c.b16 %v342, %v341
      %v360 = vpack.c.b16 %v344, %v343
      %v393 = vunpack.c.l.b16 %v258
      %v394 = vunpack.c.l.b16 %v259
      %v395 = vunpack.c.l.b16 %v260
      %v396 = vunpack.c.l.b16 %v261
      %v397 = vunpack.c.l.b16 %v262
      %v398 = vunpack.c.l.b16 %v263
      %v399 = vunpack.c.l.b16 %v264
      %v400 = vunpack.c.l.b16 %v265
      %v401 = vunpack.c.l.b16 %v266
      %v402 = vunpack.c.l.b16 %v267
      %v403 = vunpack.c.l.b16 %v268
      %v404 = vunpack.c.l.b16 %v269
      %v405 = vunpack.c.l.b16 %v270
      %v406 = vunpack.c.l.b16 %v271
      %v407 = vunpack.c.l.b16 %v272
      %v408 = vunpack.c.l.b16 %v273
      %v409 = vpack.c.b16 %v394, %v393
      %v410 = vpack.c.b16 %v396, %v395
      %v411 = vpack.c.b16 %v398, %v397
      %v412 = vpack.c.b16 %v400, %v399
      %v413 = vpack.c.b16 %v402, %v401
      %v414 = vpack.c.b16 %v404, %v403
      %v415 = vpack.c.b16 %v406, %v405
      %v416 = vpack.c.b16 %v408, %v407
      %425 = vmatprep.subr.bf16.mxu0 0
      %426 = vmatpush1.bf16.msra.mxu0 %v409
      %427 = vmatprep.subr.bf16.mxu0 0
      %428 = vmatpush1.bf16.msra.mxu0 %v410
      %429 = vmatprep.subr.bf16.mxu0 0
      %430 = vmatpush1.bf16.msra.mxu0 %v411
      %431 = vmatprep.subr.bf16.mxu0 0
      %432 = vmatpush1.bf16.msra.mxu0 %v412
      %433 = vmatprep.subr.bf16.mxu0 0
      %434 = vmatpush1.bf16.msra.mxu0 %v413
      %435 = vmatprep.subr.bf16.mxu0 0
      %436 = vmatpush1.bf16.msra.mxu0 %v414
      %437 = vmatprep.subr.bf16.mxu0 0
      %438 = vmatpush1.bf16.msra.mxu0 %v415
      %439 = vmatprep.subr.bf16.mxu0 0
      %440 = vmatpush1.bf16.msra.mxu0 %v416
      %441 = vmatprep.subr.bf16.mxu0 0
      %442 = vmatpush1.bf16.msra.mxu0 0
      %443 = vmatprep.subr.bf16.mxu0 0
      %444 = vmatpush1.bf16.msra.mxu0 0
      %445 = vmatprep.subr.bf16.mxu0 0
      %446 = vmatpush1.bf16.msra.mxu0 0
      %447 = vmatprep.subr.bf16.mxu0 0
      %448 = vmatpush1.bf16.msra.mxu0 0
      %449 = vmatprep.subr.bf16.mxu0 0
      %450 = vmatpush1.bf16.msra.mxu0 0
      %451 = vmatprep.subr.bf16.mxu0 0
      %452 = vmatpush1.bf16.msra.mxu0 0
      %453 = vmatprep.subr.bf16.mxu0 0
      %454 = vmatpush1.bf16.msra.mxu0 0
      %455 = vmatprep.subr.bf16.mxu0 0
      %456 = vmatpush1.bf16.msra.mxu0 0
      %457 = vmatprep.mubr.bf16.mxu0 0
      %458 = vmatmul.mubr.bf16.gmra.mrb[0].mxu0 %v345
      %v459 = vpop.f32.mrb[0].mxu0
      %v460 = vadd.f32 %v279, %v459
      %v461 = vpop.f32.mrb[0].mxu0
      %v462 = vpop.f32.mrb[0].mxu0
      %v463 = vadd.f32 %v279, %v462
      %v464 = vpop.f32.mrb[0].mxu0
      %465 = vmatprep.mubr.bf16.mxu0 0
      %466 = vmatmul.mubr.bf16.gmra.mrb[0].mxu0 %v346
      %v467 = vpop.f32.mrb[0].mxu0
      %v468 = vadd.f32 %v279, %v467
      %v469 = vpop.f32.mrb[0].mxu0
      %v470 = vpop.f32.mrb[0].mxu0
      %v471 = vadd.f32 %v279, %v470
      %v472 = vpop.f32.mrb[0].mxu0
      %473 = vmatprep.mubr.bf16.mxu0 0
      %474 = vmatmul.mubr.bf16.gmra.mrb[0].mxu0 %v347
      %v475 = vpop.f32.mrb[0].mxu0
      %v476 = vadd.f32 %v279, %v475
      %v477 = vpop.f32.mrb[0].mxu0
      %v478 = vpop.f32.mrb[0].mxu0
      %v479 = vadd.f32 %v279, %v478
      %v480 = vpop.f32.mrb[0].mxu0
      %481 = vmatprep.mubr.bf16.mxu0 0
      %482 = vmatmul.mubr.bf16.gmra.mrb[0].mxu0 %v348
      %v483 = vpop.f32.mrb[0].mxu0
      %v484 = vadd.f32 %v279, %v483
      %v485 = vpop.f32.mrb[0].mxu0
      %v486 = vpop.f32.mrb[0].mxu0
      %v487 = vadd.f32 %v279, %v486
      %v488 = vpop.f32.mrb[0].mxu0
      %489 = vmatprep.mubr.bf16.mxu0 0
      %490 = vmatmul.mubr.bf16.gmra.mrb[0].mxu0 %v349
      %v491 = vpop.f32.mrb[0].mxu0
      %v492 = vadd.f32 %v279, %v491
      %v493 = vpop.f32.mrb[0].mxu0
      %v494 = vpop.f32.mrb[0].mxu0
      %v495 = vadd.f32 %v279, %v494
      %v496 = vpop.f32.mrb[0].mxu0
      %497 = vmatprep.mubr.bf16.mxu0 0
      %498 = vmatmul.mubr.bf16.gmra.mrb[0].mxu0 %v350
      %v499 = vpop.f32.mrb[0].mxu0
      %v500 = vadd.f32 %v279, %v499
      %v501 = vpop.f32.mrb[0].mxu0
      %v502 = vpop.f32.mrb[0].mxu0
      %v503 = vadd.f32 %v279, %v502
      %v504 = vpop.f32.mrb[0].mxu0
      %505 = vmatprep.mubr.bf16.mxu0 0
      %506 = vmatmul.mubr.bf16.gmra.mrb[0].mxu0 %v351
      %v507 = vpop.f32.mrb[0].mxu0
      %v508 = vadd.f32 %v279, %v507
      %v509 = vpop.f32.mrb[0].mxu0
      %v510 = vpop.f32.mrb[0].mxu0
      %v511 = vadd.f32 %v279, %v510
      %v512 = vpop.f32.mrb[0].mxu0
      %513 = vmatprep.mubr.bf16.mxu0 0
      %514 = vmatmul.mubr.bf16.gmra.mrb[0].mxu0 %v352
      %v515 = vpop.f32.mrb[0].mxu0
      %v516 = vadd.f32 %v279, %v515
      %v517 = vpop.f32.mrb[0].mxu0
      %v518 = vpop.f32.mrb[0].mxu0
      %v519 = vadd.f32 %v279, %v518
      %v520 = vpop.f32.mrb[0].mxu0
      %521 = vmatprep.mubr.bf16.mxu0 0
      %522 = vmatmul.mubr.bf16.gmra.mrb[0].mxu0 %v353
      %v523 = vpop.f32.mrb[0].mxu0
      %v524 = vadd.f32 %v279, %v523
      %v525 = vpop.f32.mrb[0].mxu0
      %v526 = vpop.f32.mrb[0].mxu0
      %v527 = vadd.f32 %v279, %v526
      %v528 = vpop.f32.mrb[0].mxu0
      %529 = vmatprep.mubr.bf16.mxu0 0
      %530 = vmatmul.mubr.bf16.gmra.mrb[0].mxu0 %v354
      %v531 = vpop.f32.mrb[0].mxu0
      %v532 = vadd.f32 %v279, %v531
      %v533 = vpop.f32.mrb[0].mxu0
      %v534 = vpop.f32.mrb[0].mxu0
      %v535 = vadd.f32 %v279, %v534
      %v536 = vpop.f32.mrb[0].mxu0
      %537 = vmatprep.mubr.bf16.mxu0 0
      %538 = vmatmul.mubr.bf16.gmra.mrb[0].mxu0 %v355
      %v539 = vpop.f32.mrb[0].mxu0
      %v540 = vadd.f32 %v279, %v539
      %v541 = vpop.f32.mrb[0].mxu0
      %v542 = vpop.f32.mrb[0].mxu0
      %v543 = vadd.f32 %v279, %v542
      %v544 = vpop.f32.mrb[0].mxu0
      %545 = vmatprep.mubr.bf16.mxu0 0
      %546 = vmatmul.mubr.bf16.gmra.mrb[0].mxu0 %v356
      %v547 = vpop.f32.mrb[0].mxu0
      %v548 = vadd.f32 %v279, %v547
      %v549 = vpop.f32.mrb[0].mxu0
      %v550 = vpop.f32.mrb[0].mxu0
      %v551 = vadd.f32 %v279, %v550
      %v552 = vpop.f32.mrb[0].mxu0
      %553 = vmatprep.mubr.bf16.mxu0 0
      %554 = vmatmul.mubr.bf16.gmra.mrb[0].mxu0 %v357
      %v555 = vpop.f32.mrb[0].mxu0
      %v556 = vadd.f32 %v279, %v555
      %v557 = vpop.f32.mrb[0].mxu0
      %v558 = vpop.f32.mrb[0].mxu0
      %v559 = vadd.f32 %v279, %v558
      %v560 = vpop.f32.mrb[0].mxu0
      %561 = vmatprep.mubr.bf16.mxu0 0
      %562 = vmatmul.mubr.bf16.gmra.mrb[0].mxu0 %v358
      %v563 = vpop.f32.mrb[0].mxu0
      %v564 = vadd.f32 %v279, %v563
      %v565 = vpop.f32.mrb[0].mxu0
      %v566 = vpop.f32.mrb[0].mxu0
      %v567 = vadd.f32 %v279, %v566
      %v568 = vpop.f32.mrb[0].mxu0
      %569 = vmatprep.mubr.bf16.mxu0 0
      %570 = vmatmul.mubr.bf16.gmra.mrb[0].mxu0 %v359
      %v571 = vpop.f32.mrb[0].mxu0
      %v572 = vadd.f32 %v279, %v571
      %v573 = vpop.f32.mrb[0].mxu0
      %v574 = vpop.f32.mrb[0].mxu0
      %v575 = vadd.f32 %v279, %v574
      %v576 = vpop.f32.mrb[0].mxu0
      %577 = vmatprep.mubr.bf16.mxu0 0
      %578 = vmatmul.mubr.bf16.gmra.mrb[0].mxu0 %v360
      %v579 = vpop.f32.mrb[0].mxu0
      %v580 = vadd.f32 %v279, %v579
      %v581 = vpop.f32.mrb[0].mxu0
      %v582 = vpop.f32.mrb[0].mxu0
      %v583 = vadd.f32 %v279, %v582
      %v584 = vpop.f32.mrb[0].mxu0
      %585 = vdwg.mxu0
      %v586 = vmax.f32 %v460, 0.0
      %v587 = vmax.f32 %v463, 0.0
      %v588 = vmax.f32 %v468, 0.0
      %v589 = vmax.f32 %v471, 0.0
      %v590 = vmax.f32 %v476, 0.0
      %v591 = vmax.f32 %v479, 0.0
      %v592 = vmax.f32 %v484, 0.0
      %v593 = vmax.f32 %v487, 0.0
      %v594 = vmax.f32 %v492, 0.0
      %v595 = vmax.f32 %v495, 0.0
      %v596 = vmax.f32 %v500, 0.0
      %v597 = vmax.f32 %v503, 0.0
      %v598 = vmax.f32 %v508, 0.0
      %v599 = vmax.f32 %v511, 0.0
      %v600 = vmax.f32 %v516, 0.0
      %v601 = vmax.f32 %v519, 0.0
      %v602 = vmax.f32 %v524, 0.0
      %v603 = vmax.f32 %v527, 0.0
      %v604 = vmax.f32 %v532, 0.0
      %v605 = vmax.f32 %v535, 0.0
      %v606 = vmax.f32 %v540, 0.0
      %v607 = vmax.f32 %v543, 0.0
      %v608 = vmax.f32 %v548, 0.0
      %v609 = vmax.f32 %v551, 0.0
      %v610 = vmax.f32 %v556, 0.0
      %v611 = vmax.f32 %v559, 0.0
      %v612 = vmax.f32 %v564, 0.0
      %v613 = vmax.f32 %v567, 0.0
      %v614 = vmax.f32 %v572, 0.0
      %v615 = vmax.f32 %v575, 0.0
      %v616 = vmax.f32 %v580, 0.0
      %v617 = vmax.f32 %v583, 0.0
      %v618 = vpack.c.bf16 %v587, %v586
      %v619 = vpack.c.bf16 %v589, %v588
      %v620 = vpack.c.bf16 %v591, %v590
      %v621 = vpack.c.bf16 %v593, %v592
      %v622 = vpack.c.bf16 %v595, %v594
      %v623 = vpack.c.bf16 %v597, %v596
      %v624 = vpack.c.bf16 %v599, %v598
      %v625 = vpack.c.bf16 %v601, %v600
      %v626 = vpack.c.bf16 %v603, %v602
      %v627 = vpack.c.bf16 %v605, %v604
      %v628 = vpack.c.bf16 %v607, %v606
      %v629 = vpack.c.bf16 %v609, %v608
      %v630 = vpack.c.bf16 %v611, %v610
      %v631 = vpack.c.bf16 %v613, %v612
      %v632 = vpack.c.bf16 %v615, %v614
      %v633 = vpack.c.bf16 %v617, %v616
      %v650 = vunpack.c.l.b16 %v618
      %v651 = vunpack.c.h.b16 %v618
      %v652 = vunpack.c.l.b16 %v619
      %v653 = vunpack.c.h.b16 %v619
      %v654 = vunpack.c.l.b16 %v620
      %v655 = vunpack.c.h.b16 %v620
      %v656 = vunpack.c.l.b16 %v621
      %v657 = vunpack.c.h.b16 %v621
      %v658 = vunpack.c.l.b16 %v622
      %v659 = vunpack.c.h.b16 %v622
      %v660 = vunpack.c.l.b16 %v623
      %v661 = vunpack.c.h.b16 %v623
      %v662 = vunpack.c.l.b16 %v624
      %v663 = vunpack.c.h.b16 %v624
      %v664 = vunpack.c.l.b16 %v625
      %v665 = vunpack.c.h.b16 %v625
      %v666 = vunpack.c.l.b16 %v626
      %v667 = vunpack.c.h.b16 %v626
      %v668 = vunpack.c.l.b16 %v627
      %v669 = vunpack.c.h.b16 %v627
      %v670 = vunpack.c.l.b16 %v628
      %v671 = vunpack.c.h.b16 %v628
      %v672 = vunpack.c.l.b16 %v629
      %v673 = vunpack.c.h.b16 %v629
      %v674 = vunpack.c.l.b16 %v630
      %v675 = vunpack.c.h.b16 %v630
      %v676 = vunpack.c.l.b16 %v631
      %v677 = vunpack.c.h.b16 %v631
      %v678 = vunpack.c.l.b16 %v632
      %v679 = vunpack.c.h.b16 %v632
      %v680 = vunpack.c.l.b16 %v633
      %v681 = vunpack.c.h.b16 %v633
      %v682 = vpack.c.b16 %v650, %v650
      %v683 = vpack.c.b16 %v651, %v651
      %v684 = vpack.c.b16 %v652, %v652
      %v685 = vpack.c.b16 %v653, %v653
      %v686 = vpack.c.b16 %v654, %v654
      %v687 = vpack.c.b16 %v655, %v655
      %v688 = vpack.c.b16 %v656, %v656
      %v689 = vpack.c.b16 %v657, %v657
      %v690 = vpack.c.b16 %v658, %v658
      %v691 = vpack.c.b16 %v659, %v659
      %v692 = vpack.c.b16 %v660, %v660
      %v693 = vpack.c.b16 %v661, %v661
      %v694 = vpack.c.b16 %v662, %v662
      %v695 = vpack.c.b16 %v663, %v663
      %v696 = vpack.c.b16 %v664, %v664
      %v697 = vpack.c.b16 %v665, %v665
      %v698 = vpack.c.b16 %v666, %v666
      %v699 = vpack.c.b16 %v667, %v667
      %v700 = vpack.c.b16 %v668, %v668
      %v701 = vpack.c.b16 %v669, %v669
      %v702 = vpack.c.b16 %v670, %v670
      %v703 = vpack.c.b16 %v671, %v671
      %v704 = vpack.c.b16 %v672, %v672
      %v705 = vpack.c.b16 %v673, %v673
      %v706 = vpack.c.b16 %v674, %v674
      %v707 = vpack.c.b16 %v675, %v675
      %v708 = vpack.c.b16 %v676, %v676
      %v709 = vpack.c.b16 %v677, %v677
      %v710 = vpack.c.b16 %v678, %v678
      %v711 = vpack.c.b16 %v679, %v679
      %v712 = vpack.c.b16 %v680, %v680
      %v713 = vpack.c.b16 %v681, %v681
      %746 = vst [vmem:[%s223] sm:$0xf] %v682
      %747 = vst [vmem:[%s223 + $0x4] sm:$0xf] %v683
      %748 = vst [vmem:[%s223 + $0x8] sm:$0xf] %v684
      %749 = vst [vmem:[%s223 + $0xc] sm:$0xf] %v685
      %750 = vst [vmem:[%s223 + $0x10] sm:$0xf] %v686
      %751 = vst [vmem:[%s223 + $0x14] sm:$0xf] %v687
      %752 = vst [vmem:[%s223 + $0x18] sm:$0xf] %v688
      %753 = vst [vmem:[%s223 + $0x1c] sm:$0xf] %v689
      %754 = vst [vmem:[%s223 + $0x20] sm:$0xf] %v690
      %755 = vst [vmem:[%s223 + $0x24] sm:$0xf] %v691
      %756 = vst [vmem:[%s223 + $0x28] sm:$0xf] %v692
      %757 = vst [vmem:[%s223 + $0x2c] sm:$0xf] %v693
      %758 = vst [vmem:[%s223 + $0x30] sm:$0xf] %v694
      %759 = vst [vmem:[%s223 + $0x34] sm:$0xf] %v695
      %760 = vst [vmem:[%s223 + $0x38] sm:$0xf] %v696
      %761 = vst [vmem:[%s223 + $0x3c] sm:$0xf] %v697
      %762 = vst [vmem:[%s223 + $0x40] sm:$0xf] %v698
      %763 = vst [vmem:[%s223 + $0x44] sm:$0xf] %v699
      %764 = vst [vmem:[%s223 + $0x48] sm:$0xf] %v700
      %765 = vst [vmem:[%s223 + $0x4c] sm:$0xf] %v701
      %766 = vst [vmem:[%s223 + $0x50] sm:$0xf] %v702
      %767 = vst [vmem:[%s223 + $0x54] sm:$0xf] %v703
      %768 = vst [vmem:[%s223 + $0x58] sm:$0xf] %v704
      %769 = vst [vmem:[%s223 + $0x5c] sm:$0xf] %v705
      %770 = vst [vmem:[%s223 + $0x60] sm:$0xf] %v706
      %771 = vst [vmem:[%s223 + $0x64] sm:$0xf] %v707
      %772 = vst [vmem:[%s223 + $0x68] sm:$0xf] %v708
      %773 = vst [vmem:[%s223 + $0x6c] sm:$0xf] %v709
      %774 = vst [vmem:[%s223 + $0x70] sm:$0xf] %v710
      %775 = vst [vmem:[%s223 + $0x74] sm:$0xf] %v711
      %776 = vst [vmem:[%s223 + $0x78] sm:$0xf] %v712
      %777 = vst [vmem:[%s223 + $0x7c] sm:$0xf] %v713
      %s778 = smul.u32 32, %s18
      %p779 = scmp.lt.s32.totalorder %s778, 63
      %s780 = scalar_select %p779, %s778, 63
      %p781 = scmp.lt.s32.totalorder %s19, 0
      %s782 = scalar_select %p781, %s19, 0
      %s783 = sadd.s32 %s782, %s780
      %s784 = smul.addr %s783, 4
      %s785 = scalar_lea.vmem %s3, %s784
      // Predicated region
      $region33: #{model_forward.4} parent=31 // pred_check
        %p786 = pneg %p124
      $region34: #{model_forward.4} parent=31 // pred_check_branch
        %788 = sbr.rel (%p786) target = $region36
      $region35: #{model_forward.4} parent=31 // pred_region
        %s789 = smul.u32 32, %s18
      $region36: #{model_forward.4} parent=31 // pred_fallthru
        _
    $region32: #{model_forward.4} parent=5 // pred_fallthru
      _
    %p790 = scmp.le.s32.totalorder 2, %s9
    // Predicated region
    $region37: #{model_forward.4} parent=5 // pred_check
      %p791 = pneg %p790
    $region38: #{model_forward.4} parent=5 // pred_check_branch
      %793 = sbr.rel (%p791) target = $region40
    $region39: #{model_forward.4} parent=5 // pred_region
      %s794 = ssub.s32 %s9, 2
      // Predicated region
      $region41: #{model_forward.4} parent=39 // pred_check
        %p795 = pneg %p130
      $region42: #{model_forward.4} parent=39 // pred_check_branch
        %797 = sbr.rel (%p795) target = $region44
      $region43: #{model_forward.4} parent=39 // pred_region
        %s798 = smul.u32 32, %s20
        %p799 = scmp.lt.s32.totalorder %s798, 63
        %s800 = scalar_select %p799, %s798, 63
        %p801 = scmp.lt.s32.totalorder %s21, 0
        %s802 = scalar_select %p801, %s21, 0
        %s803 = sadd.s32 %s802, %s800
        %s804 = smul.addr %s803, 4
        %s805 = scalar_lea.vmem %s3, %s804
      $region44: #{model_forward.4} parent=39 // pred_fallthru
        _
    $region40: #{model_forward.4} parent=5 // pred_fallthru
      _
  $region6: #{model_forward.4} parent=0 // loop_footer
    %s13 = sadd.s32 1, %s9
  $region7: #{model_forward.4} parent=0 // loop_footer_branch
    %8 = sbr.rel target = $region3
  $region8: #{model_forward.4} parent=0 // loop_exit
    _

// kernel: model_forward.5
$region0: #{model_forward.5}
  #allocation0 [shape = 'u32[]', space=smem, size = 0x4, offset = 0x4, fixed_abs, tag = 'smem constant byte address 0x4 - core index']
  #allocation1 [shape = 'u32[144,128]{1,0:T(1,128)}', space=vmem, size = 0x12000, scoped, tag = 'internal scratch']
  %s0 = inlined_call_operand.vmem [shape: bf16[128,128], index: 0, kind: input, shape index: {}]
  %s1 = inlined_call_operand.vmem [shape: bf16[128,128], index: 1, kind: input, shape index: {}]
  %s2 = inlined_call_operand.vmem [shape: f32[1,128], index: 2, kind: input, shape index: {}]
  %s3 = inlined_call_operand.vmem [shape: bf16[128,128], index: 3, kind: output, shape index: {}]
  %s4 = sld [smem:[#allocation0]]
  $region45: #{model_forward.5} parent=0
    _
  %s6 = ssub.s32 1, %s4
  %s7 = scalar_select 0, %s6, %s4
  loop: start=0, step=1, limit=4
  $region2: #{model_forward.5} parent=0 // loop_pre_header
    _
  $region3: #{model_forward.5} parent=0 // loop_header
    %s9 = sphi 0, %s13
    %p10 = scmp.ge.s32.totalorder %s9, 4
    %s16 = sphi 0, %s28
    %s17 = sphi 0, %s24
    %s18 = sphi 0, %s16
    %s19 = sphi 0, %s17
    %s20 = sphi 0, %s18
    %s21 = sphi 0, %s19
    %s31 = sphi 0, %s33
    %s34 = sphi 0, %s31
    %s35 = sphi 0, %s34
    %s51 = sphi 0, %s35
    %s57 = sphi 0, %s59
    %s60 = sphi 0, %s57
    %s61 = sphi 0, %s60
    %s77 = sphi 0, %s61
    %s83 = sphi 0, %s85
    %s86 = sphi 0, %s83
    %s87 = sphi 0, %s86
    %s103 = sphi 0, %s87
    %s111 = sphi 0, %s113
    %s114 = sphi 0, %s111
    %s115 = sphi 0, %s114
    %s131 = sphi 0, %s115
  $region4: #{model_forward.5} parent=0 // loop_header_branch
    %12 = sbr.rel (%p10) target = $region8
  $region5: #{model_forward.5} parent=0 // loop_body
    %s14 = ssub.s32 %s9, 1
    %s15 = ssub.s32 %s9, 2
    %s22 = sadd.s32 1, %s17
    %p23 = scmp.ge.s32.totalorder %s22, 1
    %s24 = scalar_select %p23, 0, %s22
    %s25 = sadd.s32 1, %s16
    %s26 = scalar_select %p23, %s25, %s16
    %p27 = scmp.ge.s32.totalorder %s26, 2
    %s28 = scalar_select %p27, 0, %s26
    %s29 = ssub.s32 %s16, %s28
    %p30 = scmp.eq.s32.totalorder %s29, 0
    %s32 = sadd.s32 %s31, 1
    %s33 = scalar_select %p30, %s31, %s32
    %p36 = pneg %p30
    %p37 = scmp.eq.s32.totalorder %s9, 1
    %p38 = por %p36, %p37
    %p39 = scmp.ne.s32.totalorder %s31, %s34
    %p40 = scmp.eq.s32.totalorder %s9, 0
    %p41 = por %p39, %p40
    %p42 = scmp.ne.s32.totalorder %s31, %s34
    %p43 = scmp.eq.s32.totalorder %s14, 1
    %p44 = por %p42, %p43
    %p45 = scmp.ne.s32.totalorder %s34, %s35
    %p46 = scmp.eq.s32.totalorder %s14, 0
    %p47 = por %p45, %p46
    %p48 = scmp.ne.s32.totalorder %s34, %s35
    %p49 = scmp.eq.s32.totalorder %s15, 1
    %p50 = por %p48, %p49
    %p52 = scmp.ne.s32.totalorder %s35, %s51
    %p53 = scmp.eq.s32.totalorder %s15, 0
    %p54 = por %p52, %p53
    %s55 = ssub.s32 %s17, %s24
    %p56 = scmp.eq.s32.totalorder %s55, 0
    %s58 = sadd.s32 %s57, 1
    %s59 = scalar_select %p56, %s57, %s58
    %p62 = pneg %p56
    %p63 = scmp.eq.s32.totalorder %s9, 1
    %p64 = por %p62, %p63
    %p65 = scmp.ne.s32.totalorder %s57, %s60
    %p66 = scmp.eq.s32.totalorder %s9, 0
    %p67 = por %p65, %p66
    %p68 = scmp.ne.s32.totalorder %s57, %s60
    %p69 = scmp.eq.s32.totalorder %s14, 1
    %p70 = por %p68, %p69
    %p71 = scmp.ne.s32.totalorder %s60, %s61
    %p72 = scmp.eq.s32.totalorder %s14, 0
    %p73 = por %p71, %p72
    %p74 = scmp.ne.s32.totalorder %s60, %s61
    %p75 = scmp.eq.s32.totalorder %s15, 1
    %p76 = por %p74, %p75
    %p78 = scmp.ne.s32.totalorder %s61, %s77
    %p79 = scmp.eq.s32.totalorder %s15, 0
    %p80 = por %p78, %p79
    %s81 = ssub.s32 %s17, %s24
    %p82 = scmp.eq.s32.totalorder %s81, 0
    %s84 = sadd.s32 %s83, 1
    %s85 = scalar_select %p82, %s83, %s84
    %p88 = pneg %p82
    %p89 = scmp.eq.s32.totalorder %s9, 1
    %p90 = por %p88, %p89
    %p91 = scmp.ne.s32.totalorder %s83, %s86
    %p92 = scmp.eq.s32.totalorder %s9, 0
    %p93 = por %p91, %p92
    %p94 = scmp.ne.s32.totalorder %s83, %s86
    %p95 = scmp.eq.s32.totalorder %s14, 1
    %p96 = por %p94, %p95
    %p97 = scmp.ne.s32.totalorder %s86, %s87
    %p98 = scmp.eq.s32.totalorder %s14, 0
    %p99 = por %p97, %p98
    %p100 = scmp.ne.s32.totalorder %s86, %s87
    %p101 = scmp.eq.s32.totalorder %s15, 1
    %p102 = por %p100, %p101
    %p104 = scmp.ne.s32.totalorder %s87, %s103
    %p105 = scmp.eq.s32.totalorder %s15, 0
    %p106 = por %p104, %p105
    %s107 = ssub.s32 %s16, %s28
    %s108 = ssub.s32 %s17, %s24
    %s109 = sor.u32 %s107, %s108
    %p110 = scmp.eq.s32.totalorder %s109, 0
    %s112 = sadd.s32 %s111, 1
    %s113 = scalar_select %p110, %s111, %s112
    %p116 = pneg %p110
    %p117 = scmp.eq.s32.totalorder %s9, 1
    %p118 = por %p116, %p117
    %p119 = scmp.ne.s32.totalorder %s111, %s114
    %p120 = scmp.eq.s32.totalorder %s9, 0
    %p121 = por %p119, %p120
    %p122 = scmp.ne.s32.totalorder %s111, %s114
    %p123 = scmp.eq.s32.totalorder %s14, 1
    %p124 = por %p122, %p123
    %p125 = scmp.ne.s32.totalorder %s114, %s115
    %p126 = scmp.eq.s32.totalorder %s14, 0
    %p127 = por %p125, %p126
    %p128 = scmp.ne.s32.totalorder %s114, %s115
    %p129 = scmp.eq.s32.totalorder %s15, 1
    %p130 = por %p128, %p129
    %p132 = scmp.ne.s32.totalorder %s115, %s131
    %p133 = scmp.eq.s32.totalorder %s15, 0
    %p134 = por %p132, %p133
    %p135 = scmp.le.s32.totalorder 1, %s9
    %p136 = scmp.lt.s32.totalorder %s9, 3
    %p137 = pnand %p135, %p136
    %p138 = pneg %p137
    // Predicated region
    $region9: #{model_forward.5} parent=5 // pred_check
      _
    $region10: #{model_forward.5} parent=5 // pred_check_branch
      %140 = sbr.rel (%p137) target = $region12
    $region11: #{model_forward.5} parent=5 // pred_region
      %s141 = ssub.s32 %s9, 1
      // Predicated region
      $region13: #{model_forward.5} parent=11 // pred_check
        %p142 = pneg %p73
      $region14: #{model_forward.5} parent=11 // pred_check_branch
        %144 = sbr.rel (%p142) target = $region16
      $region15: #{model_forward.5} parent=11 // pred_region
        %p145 = scmp.lt.s32.totalorder %s19, 0
        %s146 = scalar_select %p145, %s19, 0
        %s147 = smul.addr %s146, 4
        %s148 = scalar_lea.vmem %s1, %s147
      $region16: #{model_forward.5} parent=11 // pred_fallthru
        _
      // Predicated region
      $region17: #{model_forward.5} parent=11 // pred_check
        %p149 = pneg %p99
      $region18: #{model_forward.5} parent=11 // pred_check_branch
        %151 = sbr.rel (%p149) target = $region20
      $region19: #{model_forward.5} parent=11 // pred_region
        %p152 = scmp.lt.s32.totalorder %s19, 0
        %s153 = scalar_select %p152, %s19, 0
        %s154 = scalar_lea.vmem %s2, %s153
      $region20: #{model_forward.5} parent=11 // pred_fallthru
        _
    $region12: #{model_forward.5} parent=5 // pred_fallthru
      _
    %p155 = scmp.lt.s32.totalorder %s9, 2
    // Predicated region
    $region21: #{model_forward.5} parent=5 // pred_check
      %p156 = pneg %p155
    $region22: #{model_forward.5} parent=5 // pred_check_branch
      %158 = sbr.rel (%p156) target = $region24
    $region23: #{model_forward.5} parent=5 // pred_region
      // Predicated region
      $region25: #{model_forward.5} parent=23 // pred_check
        %p159 = pneg %p41
      $region26: #{model_forward.5} parent=23 // pred_check_branch
        %161 = sbr.rel (%p159) target = $region28
      $region27: #{model_forward.5} parent=23 // pred_region
        %s162 = smul.u32 8, %s16
        %p163 = scmp.lt.s32.totalorder %s162, 15
        %s164 = scalar_select %p163, %s162, 15
        %s165 = smul.addr %s164, 4
        %s166 = scalar_lea.vmem %s0, %s165
        %s167 = smul.u32 8, %s16
      $region28: #{model_forward.5} parent=23 // pred_fallthru
        _
    $region24: #{model_forward.5} parent=5 // pred_fallthru
      _
    %p168 = scmp.le.s32.totalorder 1, %s9
    %p169 = scmp.lt.s32.totalorder %s9, 3
    %p170 = pnand %p168, %p169
    %p171 = pneg %p170
    // Predicated region
    $region29: #{model_forward.5} parent=5 // pred_check
      _
    $region30: #{model_forward.5} parent=5 // pred_check_branch
      %173 = sbr.rel (%p170) target = $region32
    $region31: #{model_forward.5} parent=5 // pred_region
      %s174 = ssub.s32 %s9, 1
      %s175 = smul.u32 8, %s18
      %p176 = scmp.lt.s32.totalorder %s175, 15
      %s177 = scalar_select %p176, %s175, 15
      %s178 = smul.addr %s177, 4
      %s179 = scalar_lea.vmem %s0, %s178
      %p180 = pneg %p47
      %p181 = pneg %p44
      %p182 = scmp.lt.s32.totalorder %s19, 0
      %s183 = scalar_select %p182, %s19, 0
      %s184 = smul.addr %s183, 4
      %s185 = scalar_lea.vmem %s1, %s184
      %p186 = pneg %p73
      %p187 = pneg %p70
      %p188 = scmp.lt.s32.totalorder %s19, 0
      %s189 = scalar_select %p188, %s19, 0
      %s190 = scalar_lea.vmem %s2, %s189
      %p191 = pneg %p99
      %p192 = pneg %p96
      %p193 = pneg %p127
      %p194 = pneg %p124
      %s195 = smul.u32 8, %s18
      %p196 = scmp.lt.s32.totalorder %s195, 15
      %s197 = scalar_select %p196, %s195, 15
      %p198 = scmp.lt.s32.totalorder %s19, 0
      %s199 = scalar_select %p198, %s19, 0
      %s200 = sadd.s32 %s199, %s197
      %s201 = smul.addr %s200, 4
      %s202 = scalar_lea.vmem %s3, %s201
      %s203 = smul.u32 8, %s18
      %p204 = scmp.lt.s32.totalorder %s203, 15
      %s205 = scalar_select %p204, %s203, 15
      %s206 = smul.addr %s205, 4
      %s207 = scalar_lea.vmem %s0, %s206
      %s208 = smul.u32 8, %s18
      %p209 = scmp.lt.s32.totalorder %s19, 0
      %s210 = scalar_select %p209, %s19, 0
      %s211 = smul.addr %s210, 4
      %s212 = scalar_lea.vmem %s1, %s211
      %p213 = scmp.lt.s32.totalorder %s19, 0
      %s214 = scalar_select %p213, %s19, 0
      %s215 = scalar_lea.vmem %s2, %s214
      %s216 = smul.u32 8, %s18
      %p217 = scmp.lt.s32.totalorder %s216, 15
      %s218 = scalar_select %p217, %s216, 15
      %p219 = scmp.lt.s32.totalorder %s19, 0
      %s220 = scalar_select %p219, %s19, 0
      %s221 = sadd.s32 %s220, %s218
      %s222 = smul.addr %s221, 4
      %s223 = scalar_lea.vmem %s3, %s222
      %s224 = smul.u32 8, %s18
      %v226 = vld [vmem:[%s207] sm:$0xf]
      %v227 = vld [vmem:[%s207 + $0x4] sm:$0xf]
      %v228 = vld [vmem:[%s207 + $0x8] sm:$0xf]
      %v229 = vld [vmem:[%s207 + $0xc] sm:$0xf]
      %v230 = vld [vmem:[%s207 + $0x10] sm:$0xf]
      %v231 = vld [vmem:[%s207 + $0x14] sm:$0xf]
      %v232 = vld [vmem:[%s207 + $0x18] sm:$0xf]
      %v233 = vld [vmem:[%s207 + $0x1c] sm:$0xf]
      %v234 = vld [vmem:[%s212] sm:$0xf]
      %v235 = vld [vmem:[%s212 + $0x4] sm:$0xf]
      %v236 = vld [vmem:[%s212 + $0x8] sm:$0xf]
      %v237 = vld [vmem:[%s212 + $0xc] sm:$0xf]
      %v238 = vld [vmem:[%s212 + $0x10] sm:$0xf]
      %v239 = vld [vmem:[%s212 + $0x14] sm:$0xf]
      %v240 = vld [vmem:[%s212 + $0x18] sm:$0xf]
      %v241 = vld [vmem:[%s212 + $0x1c] sm:$0xf]
      %v242 = vld [vmem:[%s212 + $0x20] sm:$0xf]
      %v243 = vld [vmem:[%s212 + $0x24] sm:$0xf]
      %v244 = vld [vmem:[%s212 + $0x28] sm:$0xf]
      %v245 = vld [vmem:[%s212 + $0x2c] sm:$0xf]
      %v246 = vld [vmem:[%s212 + $0x30] sm:$0xf]
      %v247 = vld [vmem:[%s212 + $0x34] sm:$0xf]
      %v248 = vld [vmem:[%s212 + $0x38] sm:$0xf]
      %v249 = vld [vmem:[%s212 + $0x3c] sm:$0xf]
      %v250 = vld [vmem:[%s215] sm:$0x1]
      %v252 = vlaneseq
      %v253 = vshrl.u32 %v252, 7
      %v254 = vsub.s32 0, %v253
      %v255 = vrot.slane %v250, %v254
      %v265 = vunpack.c.l.b16 %v226
      %v266 = vunpack.c.l.b16 %v227
      %v267 = vunpack.c.l.b16 %v228
      %v268 = vunpack.c.l.b16 %v229
      %v269 = vunpack.c.l.b16 %v230
      %v270 = vunpack.c.l.b16 %v231
      %v271 = vunpack.c.l.b16 %v232
      %v272 = vunpack.c.l.b16 %v233
      %v273 = vpack.c.b16 %v266, %v265
      %v274 = vpack.c.b16 %v268, %v267
      %v275 = vpack.c.b16 %v270, %v269
      %v276 = vpack.c.b16 %v272, %v271
      %v297 = vunpack.c.l.b16 %v234
      %v298 = vunpack.c.l.b16 %v235
      %v299 = vunpack.c.l.b16 %v236
      %v300 = vunpack.c.l.b16 %v237
      %v301 = vunpack.c.l.b16 %v238
      %v302 = vunpack.c.l.b16 %v239
      %v303 = vunpack.c.l.b16 %v240
      %v304 = vunpack.c.l.b16 %v241
      %v305 = vunpack.c.l.b16 %v242
      %v306 = vunpack.c.l.b16 %v243
      %v307 = vunpack.c.l.b16 %v244
      %v308 = vunpack.c.l.b16 %v245
      %v309 = vunpack.c.l.b16 %v246
      %v310 = vunpack.c.l.b16 %v247
      %v311 = vunpack.c.l.b16 %v248
      %v312 = vunpack.c.l.b16 %v249
      %v313 = vpack.c.b16 %v298, %v297
      %v314 = vpack.c.b16 %v300, %v299
      %v315 = vpack.c.b16 %v302, %v301
      %v316 = vpack.c.b16 %v304, %v303
      %v317 = vpack.c.b16 %v306, %v305
      %v318 = vpack.c.b16 %v308, %v307
      %v319 = vpack.c.b16 %v310, %v309
      %v320 = vpack.c.b16 %v312, %v311
      %329 = vmatprep.subr.bf16.mxu0 0
      %330 = vmatpush1.bf16.msra.mxu0 %v313
      %331 = vmatprep.subr.bf16.mxu0 0
      %332 = vmatpush1.bf16.msra.mxu0 %v314
      %333 = vmatprep.subr.bf16.mxu0 0
      %334 = vmatpush1.bf16.msra.mxu0 %v315
      %335 = vmatprep.subr.bf16.mxu0 0
      %336 = vmatpush1.bf16.msra.mxu0 %v316
      %337 = vmatprep.subr.bf16.mxu0 0
      %338 = vmatpush1.bf16.msra.mxu0 %v317
      %339 = vmatprep.subr.bf16.mxu0 0
      %340 = vmatpush1.bf16.msra.mxu0 %v318
      %341 = vmatprep.subr.bf16.mxu0 0
      %342 = vmatpush1.bf16.msra.mxu0 %v319
      %343 = vmatprep.subr.bf16.mxu0 0
      %344 = vmatpush1.bf16.msra.mxu0 %v320
      %345 = vmatprep.subr.bf16.mxu0 0
      %346 = vmatpush1.bf16.msra.mxu0 0
      %347 = vmatprep.subr.bf16.mxu0 0
      %348 = vmatpush1.bf16.msra.mxu0 0
      %349 = vmatprep.subr.bf16.mxu0 0
      %350 = vmatpush1.bf16.msra.mxu0 0
      %351 = vmatprep.subr.bf16.mxu0 0
      %352 = vmatpush1.bf16.msra.mxu0 0
      %353 = vmatprep.subr.bf16.mxu0 0
      %354 = vmatpush1.bf16.msra.mxu0 0
      %355 = vmatprep.subr.bf16.mxu0 0
      %356 = vmatpush1.bf16.msra.mxu0 0
      %357 = vmatprep.subr.bf16.mxu0 0
      %358 = vmatpush1.bf16.msra.mxu0 0
      %359 = vmatprep.subr.bf16.mxu0 0
      %360 = vmatpush1.bf16.msra.mxu0 0
      %361 = vmatprep.mubr.bf16.mxu0 0
      %362 = vmatmul.mubr.bf16.gmra.mrb[0].mxu0 %v273
      %v363 = vpop.f32.mrb[0].mxu0
      %v364 = vadd.f32 %v255, %v363
      %v365 = vpop.f32.mrb[0].mxu0
      %v366 = vpop.f32.mrb[0].mxu0
      %v367 = vadd.f32 %v255, %v366
      %v368 = vpop.f32.mrb[0].mxu0
      %369 = vmatprep.mubr.bf16.mxu0 0
      %370 = vmatmul.mubr.bf16.gmra.mrb[0].mxu0 %v274
      %v371 = vpop.f32.mrb[0].mxu0
      %v372 = vadd.f32 %v255, %v371
      %v373 = vpop.f32.mrb[0].mxu0
      %v374 = vpop.f32.mrb[0].mxu0
      %v375 = vadd.f32 %v255, %v374
      %v376 = vpop.f32.mrb[0].mxu0
      %377 = vmatprep.mubr.bf16.mxu0 0
      %378 = vmatmul.mubr.bf16.gmra.mrb[0].mxu0 %v275
      %v379 = vpop.f32.mrb[0].mxu0
      %v380 = vadd.f32 %v255, %v379
      %v381 = vpop.f32.mrb[0].mxu0
      %v382 = vpop.f32.mrb[0].mxu0
      %v383 = vadd.f32 %v255, %v382
      %v384 = vpop.f32.mrb[0].mxu0
      %385 = vmatprep.mubr.bf16.mxu0 0
      %386 = vmatmul.mubr.bf16.gmra.mrb[0].mxu0 %v276
      %v387 = vpop.f32.mrb[0].mxu0
      %v388 = vadd.f32 %v255, %v387
      %v389 = vpop.f32.mrb[0].mxu0
      %v390 = vpop.f32.mrb[0].mxu0
      %v391 = vadd.f32 %v255, %v390
      %v392 = vpop.f32.mrb[0].mxu0
      %393 = vdwg.mxu0
      %v394 = vmax.f32 %v364, 0.0
      %v395 = vmax.f32 %v367, 0.0
      %v396 = vmax.f32 %v372, 0.0
      %v397 = vmax.f32 %v375, 0.0
      %v398 = vmax.f32 %v380, 0.0
      %v399 = vmax.f32 %v383, 0.0
      %v400 = vmax.f32 %v388, 0.0
      %v401 = vmax.f32 %v391, 0.0
      %v402 = vpack.c.bf16 %v395, %v394
      %v403 = vpack.c.bf16 %v397, %v396
      %v404 = vpack.c.bf16 %v399, %v398
      %v405 = vpack.c.bf16 %v401, %v400
      %v410 = vunpack.c.l.b16 %v402
      %v411 = vunpack.c.h.b16 %v402
      %v412 = vunpack.c.l.b16 %v403
      %v413 = vunpack.c.h.b16 %v403
      %v414 = vunpack.c.l.b16 %v404
      %v415 = vunpack.c.h.b16 %v404
      %v416 = vunpack.c.l.b16 %v405
      %v417 = vunpack.c.h.b16 %v405
      %v418 = vpack.c.b16 %v410, %v410
      %v419 = vpack.c.b16 %v411, %v411
      %v420 = vpack.c.b16 %v412, %v412
      %v421 = vpack.c.b16 %v413, %v413
      %v422 = vpack.c.b16 %v414, %v414
      %v423 = vpack.c.b16 %v415, %v415
      %v424 = vpack.c.b16 %v416, %v416
      %v425 = vpack.c.b16 %v417, %v417
      %434 = vst [vmem:[%s223] sm:$0xf] %v418
      %435 = vst [vmem:[%s223 + $0x4] sm:$0xf] %v419
      %436 = vst [vmem:[%s223 + $0x8] sm:$0xf] %v420
      %437 = vst [vmem:[%s223 + $0xc] sm:$0xf] %v421
      %438 = vst [vmem:[%s223 + $0x10] sm:$0xf] %v422
      %439 = vst [vmem:[%s223 + $0x14] sm:$0xf] %v423
      %440 = vst [vmem:[%s223 + $0x18] sm:$0xf] %v424
      %441 = vst [vmem:[%s223 + $0x1c] sm:$0xf] %v425
      %s442 = smul.u32 8, %s18
      %p443 = scmp.lt.s32.totalorder %s442, 15
      %s444 = scalar_select %p443, %s442, 15
      %p445 = scmp.lt.s32.totalorder %s19, 0
      %s446 = scalar_select %p445, %s19, 0
      %s447 = sadd.s32 %s446, %s444
      %s448 = smul.addr %s447, 4
      %s449 = scalar_lea.vmem %s3, %s448
      // Predicated region
      $region33: #{model_forward.5} parent=31 // pred_check
        %p450 = pneg %p124
      $region34: #{model_forward.5} parent=31 // pred_check_branch
        %452 = sbr.rel (%p450) target = $region36
      $region35: #{model_forward.5} parent=31 // pred_region
        %s453 = smul.u32 8, %s18
      $region36: #{model_forward.5} parent=31 // pred_fallthru
        _
    $region32: #{model_forward.5} parent=5 // pred_fallthru
      _
    %p454 = scmp.le.s32.totalorder 2, %s9
    // Predicated region
    $region37: #{model_forward.5} parent=5 // pred_check
      %p455 = pneg %p454
    $region38: #{model_forward.5} parent=5 // pred_check_branch
      %457 = sbr.rel (%p455) target = $region40
    $region39: #{model_forward.5} parent=5 // pred_region
      %s458 = ssub.s32 %s9, 2
      // Predicated region
      $region41: #{model_forward.5} parent=39 // pred_check
        %p459 = pneg %p130
      $region42: #{model_forward.5} parent=39 // pred_check_branch
        %461 = sbr.rel (%p459) target = $region44
      $region43: #{model_forward.5} parent=39 // pred_region
        %s462 = smul.u32 8, %s20
        %p463 = scmp.lt.s32.totalorder %s462, 15
        %s464 = scalar_select %p463, %s462, 15
        %p465 = scmp.lt.s32.totalorder %s21, 0
        %s466 = scalar_select %p465, %s21, 0
        %s467 = sadd.s32 %s466, %s464
        %s468 = smul.addr %s467, 4
        %s469 = scalar_lea.vmem %s3, %s468
      $region44: #{model_forward.5} parent=39 // pred_fallthru
        _
    $region40: #{model_forward.5} parent=5 // pred_fallthru
      _
  $region6: #{model_forward.5} parent=0 // loop_footer
    %s13 = sadd.s32 1, %s9
  $region7: #{model_forward.5} parent=0 // loop_footer_branch
    %8 = sbr.rel target = $region3
  $region8: #{model_forward.5} parent=0 // loop_exit
    _

// kernel: model_forward.6
$region0: #{model_forward.6}
  #allocation0 [shape = 'u32[]', space=smem, size = 0x4, offset = 0x4, fixed_abs, tag = 'smem constant byte address 0x4 - core index']
  #allocation1 [shape = 'u32[144,128]{1,0:T(1,128)}', space=vmem, size = 0x12000, scoped, tag = 'internal scratch']
  %s0 = inlined_call_operand.vmem [shape: bf16[16,128], index: 0, kind: input, shape index: {}]
  %s1 = inlined_call_operand.vmem [shape: bf16[128,128], index: 1, kind: input, shape index: {}]
  %s2 = inlined_call_operand.vmem [shape: f32[1,128], index: 2, kind: input, shape index: {}]
  %s3 = inlined_call_operand.vmem [shape: f32[16,128], index: 3, kind: output, shape index: {}]
  %s4 = sld [smem:[#allocation0]]
  $region22: #{model_forward.6} parent=0
    _
  %s6 = ssub.s32 1, %s4
  %s7 = scalar_select 0, %s6, %s4
  // Predicated region
  $region2: #{model_forward.6} parent=0 // pred_check
    _
  $region3: #{model_forward.6} parent=0 // pred_check_branch
    %9 = sbr.rel (0) target = $region5
  $region4: #{model_forward.6} parent=0 // pred_region
    _
  $region5: #{model_forward.6} parent=0 // pred_fallthru
    _
  // Predicated region
  $region6: #{model_forward.6} parent=0 // pred_check
    _
  $region7: #{model_forward.6} parent=0 // pred_check_branch
    %11 = sbr.rel (0) target = $region9
  $region8: #{model_forward.6} parent=0 // pred_region
    _
  $region9: #{model_forward.6} parent=0 // pred_fallthru
    _
  // Predicated region
  $region10: #{model_forward.6} parent=0 // pred_check
    _
  $region11: #{model_forward.6} parent=0 // pred_check_branch
    %13 = sbr.rel (0) target = $region13
  $region12: #{model_forward.6} parent=0 // pred_region
    _
  $region13: #{model_forward.6} parent=0 // pred_fallthru
    _
  %v15 = vld [vmem:[%s0] sm:$0xf]
  %v16 = vld [vmem:[%s0 + $0x4] sm:$0xf]
  %v17 = vld [vmem:[%s1] sm:$0xf]
  %v18 = vld [vmem:[%s1 + $0x4] sm:$0xf]
  %v19 = vld [vmem:[%s1 + $0x8] sm:$0xf]
  %v20 = vld [vmem:[%s1 + $0xc] sm:$0xf]
  %v21 = vld [vmem:[%s1 + $0x10] sm:$0xf]
  %v22 = vld [vmem:[%s1 + $0x14] sm:$0xf]
  %v23 = vld [vmem:[%s1 + $0x18] sm:$0xf]
  %v24 = vld [vmem:[%s1 + $0x1c] sm:$0xf]
  %v25 = vld [vmem:[%s1 + $0x20] sm:$0xf]
  %v26 = vld [vmem:[%s1 + $0x24] sm:$0xf]
  %v27 = vld [vmem:[%s1 + $0x28] sm:$0xf]
  %v28 = vld [vmem:[%s1 + $0x2c] sm:$0xf]
  %v29 = vld [vmem:[%s1 + $0x30] sm:$0xf]
  %v30 = vld [vmem:[%s1 + $0x34] sm:$0xf]
  %v31 = vld [vmem:[%s1 + $0x38] sm:$0xf]
  %v32 = vld [vmem:[%s1 + $0x3c] sm:$0xf]
  %v33 = vld [vmem:[%s2] sm:$0x1]
  %v35 = vlaneseq
  %v36 = vshrl.u32 %v35, 7
  %v37 = vsub.s32 0, %v36
  %v38 = vrot.slane %v33, %v37
  %v42 = vunpack.c.l.b16 %v15
  %v43 = vunpack.c.l.b16 %v16
  %v44 = vpack.c.b16 %v43, %v42
  %v62 = vunpack.c.l.b16 %v17
  %v63 = vunpack.c.l.b16 %v18
  %v64 = vunpack.c.l.b16 %v19
  %v65 = vunpack.c.l.b16 %v20
  %v66 = vunpack.c.l.b16 %v21
  %v67 = vunpack.c.l.b16 %v22
  %v68 = vunpack.c.l.b16 %v23
  %v69 = vunpack.c.l.b16 %v24
  %v70 = vunpack.c.l.b16 %v25
  %v71 = vunpack.c.l.b16 %v26
  %v72 = vunpack.c.l.b16 %v27
  %v73 = vunpack.c.l.b16 %v28
  %v74 = vunpack.c.l.b16 %v29
  %v75 = vunpack.c.l.b16 %v30
  %v76 = vunpack.c.l.b16 %v31
  %v77 = vunpack.c.l.b16 %v32
  %v78 = vpack.c.b16 %v63, %v62
  %v79 = vpack.c.b16 %v65, %v64
  %v80 = vpack.c.b16 %v67, %v66
  %v81 = vpack.c.b16 %v69, %v68
  %v82 = vpack.c.b16 %v71, %v70
  %v83 = vpack.c.b16 %v73, %v72
  %v84 = vpack.c.b16 %v75, %v74
  %v85 = vpack.c.b16 %v77, %v76
  %94 = vmatprep.subr.bf16.mxu0 0
  %95 = vmatpush1.bf16.msra.mxu0 %v78
  %96 = vmatprep.subr.bf16.mxu0 0
  %97 = vmatpush1.bf16.msra.mxu0 %v79
  %98 = vmatprep.subr.bf16.mxu0 0
  %99 = vmatpush1.bf16.msra.mxu0 %v80
  %100 = vmatprep.subr.bf16.mxu0 0
  %101 = vmatpush1.bf16.msra.mxu0 %v81
  %102 = vmatprep.subr.bf16.mxu0 0
  %103 = vmatpush1.bf16.msra.mxu0 %v82
  %104 = vmatprep.subr.bf16.mxu0 0
  %105 = vmatpush1.bf16.msra.mxu0 %v83
  %106 = vmatprep.subr.bf16.mxu0 0
  %107 = vmatpush1.bf16.msra.mxu0 %v84
  %108 = vmatprep.subr.bf16.mxu0 0
  %109 = vmatpush1.bf16.msra.mxu0 %v85
  %110 = vmatprep.subr.bf16.mxu0 0
  %111 = vmatpush1.bf16.msra.mxu0 0
  %112 = vmatprep.subr.bf16.mxu0 0
  %113 = vmatpush1.bf16.msra.mxu0 0
  %114 = vmatprep.subr.bf16.mxu0 0
  %115 = vmatpush1.bf16.msra.mxu0 0
  %116 = vmatprep.subr.bf16.mxu0 0
  %117 = vmatpush1.bf16.msra.mxu0 0
  %118 = vmatprep.subr.bf16.mxu0 0
  %119 = vmatpush1.bf16.msra.mxu0 0
  %120 = vmatprep.subr.bf16.mxu0 0
  %121 = vmatpush1.bf16.msra.mxu0 0
  %122 = vmatprep.subr.bf16.mxu0 0
  %123 = vmatpush1.bf16.msra.mxu0 0
  %124 = vmatprep.subr.bf16.mxu0 0
  %125 = vmatpush1.bf16.msra.mxu0 0
  %126 = vmatprep.mubr.bf16.mxu0 0
  %127 = vmatmul.mubr.bf16.gmra.mrb[0].mxu0 %v44
  %v128 = vpop.f32.mrb[0].mxu0
  %v129 = vadd.f32 %v38, %v128
  %v130 = vpop.f32.mrb[0].mxu0
  %v131 = vpop.f32.mrb[0].mxu0
  %v132 = vadd.f32 %v38, %v131
  %v133 = vpop.f32.mrb[0].mxu0
  %134 = vdwg.mxu0
  %135 = vst [vmem:[%s3] sm:$0xff] %v129
  %136 = vst [vmem:[%s3 + $0x8] sm:$0xff] %v132
  // Predicated region
  $region14: #{model_forward.6} parent=0 // pred_check
    _
  $region15: #{model_forward.6} parent=0 // pred_check_branch
    %138 = sbr.rel (0) target = $region17
  $region16: #{model_forward.6} parent=0 // pred_region
    _
  $region17: #{model_forward.6} parent=0 // pred_fallthru
    _
  // Predicated region
  $region18: #{model_forward.6} parent=0 // pred_check
    _
  $region19: #{model_forward.6} parent=0 // pred_check_branch
    %140 = sbr.rel (0) target = $region21
  $region20: #{model_forward.6} parent=0 // pred_region
    _
  $region21: #{model_forward.6} parent=0 // pred_fallthru
    _

// kernel: model_forward.7
$region0: #{model_forward.7}
  #allocation0 [shape = 'u32[]', space=smem, size = 0x4, offset = 0x4, fixed_abs, tag = 'smem constant byte address 0x4 - core index']
  #allocation1 [shape = 'u32[144,128]{1,0:T(1,128)}', space=vmem, size = 0x12000, scoped, tag = 'internal scratch']
  %s0 = inlined_call_operand.vmem [shape: bf16[16,128], index: 0, kind: input, shape index: {}]
  %s1 = inlined_call_operand.vmem [shape: bf16[128,128], index: 1, kind: input, shape index: {}]
  %s2 = inlined_call_operand.vmem [shape: f32[1,128], index: 2, kind: input, shape index: {}]
  %s3 = inlined_call_operand.vmem [shape: bf16[128,128], index: 3, kind: input, shape index: {}]
  %s4 = inlined_call_operand.vmem [shape: f32[1,128], index: 4, kind: input, shape index: {}]
  %s5 = inlined_call_operand.vmem [shape: f32[16,128], index: 5, kind: output, shape index: {}]
  %s6 = sld [smem:[#allocation0]]
  $region30: #{model_forward.7} parent=0
    _
  %s8 = ssub.s32 1, %s6
  %s9 = scalar_select 0, %s8, %s6
  // Predicated region
  $region2: #{model_forward.7} parent=0 // pred_check
    _
  $region3: #{model_forward.7} parent=0 // pred_check_branch
    %11 = sbr.rel (0) target = $region5
  $region4: #{model_forward.7} parent=0 // pred_region
    _
  $region5: #{model_forward.7} parent=0 // pred_fallthru
    _
  // Predicated region
  $region6: #{model_forward.7} parent=0 // pred_check
    _
  $region7: #{model_forward.7} parent=0 // pred_check_branch
    %13 = sbr.rel (0) target = $region9
  $region8: #{model_forward.7} parent=0 // pred_region
    _
  $region9: #{model_forward.7} parent=0 // pred_fallthru
    _
  // Predicated region
  $region10: #{model_forward.7} parent=0 // pred_check
    _
  $region11: #{model_forward.7} parent=0 // pred_check_branch
    %15 = sbr.rel (0) target = $region13
  $region12: #{model_forward.7} parent=0 // pred_region
    _
  $region13: #{model_forward.7} parent=0 // pred_fallthru
    _
  // Predicated region
  $region14: #{model_forward.7} parent=0 // pred_check
    _
  $region15: #{model_forward.7} parent=0 // pred_check_branch
    %17 = sbr.rel (0) target = $region17
  $region16: #{model_forward.7} parent=0 // pred_region
    _
  $region17: #{model_forward.7} parent=0 // pred_fallthru
    _
  // Predicated region
  $region18: #{model_forward.7} parent=0 // pred_check
    _
  $region19: #{model_forward.7} parent=0 // pred_check_branch
    %19 = sbr.rel (0) target = $region21
  $region20: #{model_forward.7} parent=0 // pred_region
    _
  $region21: #{model_forward.7} parent=0 // pred_fallthru
    _
  %v21 = vld [vmem:[%s0] sm:$0xf]
  %v22 = vld [vmem:[%s0 + $0x4] sm:$0xf]
  %v23 = vld [vmem:[%s1] sm:$0xf]
  %v24 = vld [vmem:[%s1 + $0x4] sm:$0xf]
  %v25 = vld [vmem:[%s1 + $0x8] sm:$0xf]
  %v26 = vld [vmem:[%s1 + $0xc] sm:$0xf]
  %v27 = vld [vmem:[%s1 + $0x10] sm:$0xf]
  %v28 = vld [vmem:[%s1 + $0x14] sm:$0xf]
  %v29 = vld [vmem:[%s1 + $0x18] sm:$0xf]
  %v30 = vld [vmem:[%s1 + $0x1c] sm:$0xf]
  %v31 = vld [vmem:[%s1 + $0x20] sm:$0xf]
  %v32 = vld [vmem:[%s1 + $0x24] sm:$0xf]
  %v33 = vld [vmem:[%s1 + $0x28] sm:$0xf]
  %v34 = vld [vmem:[%s1 + $0x2c] sm:$0xf]
  %v35 = vld [vmem:[%s1 + $0x30] sm:$0xf]
  %v36 = vld [vmem:[%s1 + $0x34] sm:$0xf]
  %v37 = vld [vmem:[%s1 + $0x38] sm:$0xf]
  %v38 = vld [vmem:[%s1 + $0x3c] sm:$0xf]
  %v39 = vld [vmem:[%s2] sm:$0x1]
  %v41 = vlaneseq
  %v42 = vshrl.u32 %v41, 7
  %v43 = vsub.s32 0, %v42
  %v44 = vrot.slane %v39, %v43
  %v48 = vunpack.c.l.b16 %v21
  %v49 = vunpack.c.l.b16 %v22
  %v50 = vpack.c.b16 %v49, %v48
  %v68 = vunpack.c.l.b16 %v23
  %v69 = vunpack.c.l.b16 %v24
  %v70 = vunpack.c.l.b16 %v25
  %v71 = vunpack.c.l.b16 %v26
  %v72 = vunpack.c.l.b16 %v27
  %v73 = vunpack.c.l.b16 %v28
  %v74 = vunpack.c.l.b16 %v29
  %v75 = vunpack.c.l.b16 %v30
  %v76 = vunpack.c.l.b16 %v31
  %v77 = vunpack.c.l.b16 %v32
  %v78 = vunpack.c.l.b16 %v33
  %v79 = vunpack.c.l.b16 %v34
  %v80 = vunpack.c.l.b16 %v35
  %v81 = vunpack.c.l.b16 %v36
  %v82 = vunpack.c.l.b16 %v37
  %v83 = vunpack.c.l.b16 %v38
  %v84 = vpack.c.b16 %v69, %v68
  %v85 = vpack.c.b16 %v71, %v70
  %v86 = vpack.c.b16 %v73, %v72
  %v87 = vpack.c.b16 %v75, %v74
  %v88 = vpack.c.b16 %v77, %v76
  %v89 = vpack.c.b16 %v79, %v78
  %v90 = vpack.c.b16 %v81, %v80
  %v91 = vpack.c.b16 %v83, %v82
  %100 = vmatprep.subr.bf16.mxu0 0
  %101 = vmatpush1.bf16.msra.mxu0 %v84
  %102 = vmatprep.subr.bf16.mxu0 0
  %103 = vmatpush1.bf16.msra.mxu0 %v85
  %104 = vmatprep.subr.bf16.mxu0 0
  %105 = vmatpush1.bf16.msra.mxu0 %v86
  %106 = vmatprep.subr.bf16.mxu0 0
  %107 = vmatpush1.bf16.msra.mxu0 %v87
  %108 = vmatprep.subr.bf16.mxu0 0
  %109 = vmatpush1.bf16.msra.mxu0 %v88
  %110 = vmatprep.subr.bf16.mxu0 0
  %111 = vmatpush1.bf16.msra.mxu0 %v89
  %112 = vmatprep.subr.bf16.mxu0 0
  %113 = vmatpush1.bf16.msra.mxu0 %v90
  %114 = vmatprep.subr.bf16.mxu0 0
  %115 = vmatpush1.bf16.msra.mxu0 %v91
  %116 = vmatprep.subr.bf16.mxu0 0
  %117 = vmatpush1.bf16.msra.mxu0 0
  %118 = vmatprep.subr.bf16.mxu0 0
  %119 = vmatpush1.bf16.msra.mxu0 0
  %120 = vmatprep.subr.bf16.mxu0 0
  %121 = vmatpush1.bf16.msra.mxu0 0
  %122 = vmatprep.subr.bf16.mxu0 0
  %123 = vmatpush1.bf16.msra.mxu0 0
  %124 = vmatprep.subr.bf16.mxu0 0
  %125 = vmatpush1.bf16.msra.mxu0 0
  %126 = vmatprep.subr.bf16.mxu0 0
  %127 = vmatpush1.bf16.msra.mxu0 0
  %128 = vmatprep.subr.bf16.mxu0 0
  %129 = vmatpush1.bf16.msra.mxu0 0
  %130 = vmatprep.subr.bf16.mxu0 0
  %131 = vmatpush1.bf16.msra.mxu0 0
  %132 = vmatprep.mubr.bf16.mxu0 0
  %133 = vmatmul.mubr.bf16.gmra.mrb[0].mxu0 %v50
  %v134 = vpop.f32.mrb[0].mxu0
  %v135 = vadd.f32 %v44, %v134
  %v136 = vpop.f32.mrb[0].mxu0
  %v137 = vpop.f32.mrb[0].mxu0
  %v138 = vadd.f32 %v44, %v137
  %v139 = vpop.f32.mrb[0].mxu0
  %140 = vdwg.mxu0
  %v141 = vmax.f32 %v135, 0.0
  %v142 = vmax.f32 %v138, 0.0
  %v143 = vpack.c.bf16 %v142, %v141
  %v144 = vld [vmem:[%s3] sm:$0xf]
  %v145 = vld [vmem:[%s3 + $0x4] sm:$0xf]
  %v146 = vld [vmem:[%s3 + $0x8] sm:$0xf]
  %v147 = vld [vmem:[%s3 + $0xc] sm:$0xf]
  %v148 = vld [vmem:[%s3 + $0x10] sm:$0xf]
  %v149 = vld [vmem:[%s3 + $0x14] sm:$0xf]
  %v150 = vld [vmem:[%s3 + $0x18] sm:$0xf]
  %v151 = vld [vmem:[%s3 + $0x1c] sm:$0xf]
  %v152 = vld [vmem:[%s3 + $0x20] sm:$0xf]
  %v153 = vld [vmem:[%s3 + $0x24] sm:$0xf]
  %v154 = vld [vmem:[%s3 + $0x28] sm:$0xf]
  %v155 = vld [vmem:[%s3 + $0x2c] sm:$0xf]
  %v156 = vld [vmem:[%s3 + $0x30] sm:$0xf]
  %v157 = vld [vmem:[%s3 + $0x34] sm:$0xf]
  %v158 = vld [vmem:[%s3 + $0x38] sm:$0xf]
  %v159 = vld [vmem:[%s3 + $0x3c] sm:$0xf]
  %v160 = vld [vmem:[%s4] sm:$0x1]
  %v162 = vlaneseq
  %v163 = vshrl.u32 %v162, 7
  %v164 = vsub.s32 0, %v163
  %v165 = vrot.slane %v160, %v164
  %v183 = vunpack.c.l.b16 %v144
  %v184 = vunpack.c.l.b16 %v145
  %v185 = vunpack.c.l.b16 %v146
  %v186 = vunpack.c.l.b16 %v147
  %v187 = vunpack.c.l.b16 %v148
  %v188 = vunpack.c.l.b16 %v149
  %v189 = vunpack.c.l.b16 %v150
  %v190 = vunpack.c.l.b16 %v151
  %v191 = vunpack.c.l.b16 %v152
  %v192 = vunpack.c.l.b16 %v153
  %v193 = vunpack.c.l.b16 %v154
  %v194 = vunpack.c.l.b16 %v155
  %v195 = vunpack.c.l.b16 %v156
  %v196 = vunpack.c.l.b16 %v157
  %v197 = vunpack.c.l.b16 %v158
  %v198 = vunpack.c.l.b16 %v159
  %v199 = vpack.c.b16 %v184, %v183
  %v200 = vpack.c.b16 %v186, %v185
  %v201 = vpack.c.b16 %v188, %v187
  %v202 = vpack.c.b16 %v190, %v189
  %v203 = vpack.c.b16 %v192, %v191
  %v204 = vpack.c.b16 %v194, %v193
  %v205 = vpack.c.b16 %v196, %v195
  %v206 = vpack.c.b16 %v198, %v197
  %215 = vmatprep.subr.bf16.mxu0 0
  %216 = vmatpush1.bf16.msra.mxu0 %v199
  %217 = vmatprep.subr.bf16.mxu0 0
  %218 = vmatpush1.bf16.msra.mxu0 %v200
  %219 = vmatprep.subr.bf16.mxu0 0
  %220 = vmatpush1.bf16.msra.mxu0 %v201
  %221 = vmatprep.subr.bf16.mxu0 0
  %222 = vmatpush1.bf16.msra.mxu0 %v202
  %223 = vmatprep.subr.bf16.mxu0 0
  %224 = vmatpush1.bf16.msra.mxu0 %v203
  %225 = vmatprep.subr.bf16.mxu0 0
  %226 = vmatpush1.bf16.msra.mxu0 %v204
  %227 = vmatprep.subr.bf16.mxu0 0
  %228 = vmatpush1.bf16.msra.mxu0 %v205
  %229 = vmatprep.subr.bf16.mxu0 0
  %230 = vmatpush1.bf16.msra.mxu0 %v206
  %231 = vmatprep.subr.bf16.mxu0 0
  %232 = vmatpush1.bf16.msra.mxu0 0
  %233 = vmatprep.subr.bf16.mxu0 0
  %234 = vmatpush1.bf16.msra.mxu0 0
  %235 = vmatprep.subr.bf16.mxu0 0
  %236 = vmatpush1.bf16.msra.mxu0 0
  %237 = vmatprep.subr.bf16.mxu0 0
  %238 = vmatpush1.bf16.msra.mxu0 0
  %239 = vmatprep.subr.bf16.mxu0 0
  %240 = vmatpush1.bf16.msra.mxu0 0
  %241 = vmatprep.subr.bf16.mxu0 0
  %242 = vmatpush1.bf16.msra.mxu0 0
  %243 = vmatprep.subr.bf16.mxu0 0
  %244 = vmatpush1.bf16.msra.mxu0 0
  %245 = vmatprep.subr.bf16.mxu0 0
  %246 = vmatpush1.bf16.msra.mxu0 0
  %247 = vmatprep.mubr.bf16.mxu0 0
  %248 = vmatmul.mubr.bf16.gmra.mrb[0].mxu0 %v143
  %v249 = vpop.f32.mrb[0].mxu0
  %v250 = vadd.f32 %v165, %v249
  %v251 = vpop.f32.mrb[0].mxu0
  %v252 = vpop.f32.mrb[0].mxu0
  %v253 = vadd.f32 %v165, %v252
  %v254 = vpop.f32.mrb[0].mxu0
  %255 = vdwg.mxu0
  %256 = vst [vmem:[%s5] sm:$0xff] %v250
  %257 = vst [vmem:[%s5 + $0x8] sm:$0xff] %v253
  // Predicated region
  $region22: #{model_forward.7} parent=0 // pred_check
    _
  $region23: #{model_forward.7} parent=0 // pred_check_branch
    %259 = sbr.rel (0) target = $region25
  $region24: #{model_forward.7} parent=0 // pred_region
    _
  $region25: #{model_forward.7} parent=0 // pred_fallthru
    _
  // Predicated region
  $region26: #{model_forward.7} parent=0 // pred_check
    _
  $region27: #{model_forward.7} parent=0 // pred_check_branch
    %261 = sbr.rel (0) target = $region29
  $region28: #{model_forward.7} parent=0 // pred_region
    _
  $region29: #{model_forward.7} parent=0 // pred_fallthru
    _

</llo_original>
